<compile_context>
chip_gen: v5e
topology: v5e:2x2
jax: 0.10.0
libtpu: 0.0.40
codegen_flags: <defaults>
</compile_context>

<pallas_src>
import functools
import math

import jax
import jax.numpy as jnp
from jax.experimental import pallas as pl
from jax.experimental.pallas import tpu as pltpu


def _round_up(v, m):
    return (v + m - 1) // m * m


def _basic_block_kernel(xb_ref, res_ref, w1_ref, b1_ref, w2_ref, b2_ref, out_ref,
                        *, H, W):
    # xb_ref : (1, Hq+6, Wq, 3*Cin) bf16  zero-padded NHWC input with the three
    #                                     kx-shifted copies stacked on channels
    # res_ref: (1, C, Hq*Wq)        bf16  identity, padded, channels-major
    # w1_ref : (9*Cin, C)           bf16  conv1 taps stacked on K, bn1 scale folded
    # b1_ref : (1, C)               f32   bn1 shift
    # w2_ref : (C, 9*C)             bf16  conv2 weight (transposed), bn2 scale folded
    # b2_ref : (C, 1)               f32   bn2 shift
    # out_ref: (1, C, Hq*Wq)              lane-dense output (channels-major rows)
    _, hb, wq, cin3 = xb_ref.shape
    hq = hb - 6
    r1 = (hq + 3) * wq             # conv1 output rows == conv2 padded-input rows
    r2 = hq * wq                   # conv2 output rows
    r2p = r2 + 2 * wq              # rows needed from each kx-shifted conv2 input
    cdt = w1_ref.dtype             # bf16 compute dtype for the MXU

    # Flattened padded input, kept in bf16.  Wq % 16 == 0 -> the reshape is
    # layout-free and every ky row offset below is sublane-tile aligned.
    xf3 = xb_ref[0].reshape(hb * wq, cin3)

    # ---- conv1: kx is pre-folded, so one aligned slice per ky and a 3-way
    #      lane concat -> single (r1, 9*Cin) @ (9*Cin, C) MXU dot.
    p1 = jnp.concatenate(
        [xf3[ky * wq: ky * wq + r1, :] for ky in range(3)], axis=1)
    acc1 = jnp.dot(p1, w1_ref[...], preferred_element_type=jnp.float32)   # (r1, C)
    y1 = jnp.maximum(acc1 + b1_ref[...], 0.0)                             # bn1 + ReLU

    # ---- in-kernel padding-ring mask (emulates conv2's zero padding) via iota.
    rows = jax.lax.broadcasted_iota(jnp.int32, (r1, 1), 0)
    if wq & (wq - 1) == 0:
        xx = rows & (wq - 1)
    else:
        xx = rows % wq
    valid = (rows >= wq) & (rows < (H + 1) * wq) & (xx >= 1) & (xx <= W)
    m = jnp.where(valid, y1, 0.0).astype(cdt)     # bf16 conv2 input, ring zeroed

    # ---- conv2: fold kx once (2 sublane-shift relayouts), then aligned ky slices;
    #      result produced directly as (C, r2) so the final store is lane-dense.
    m3 = jnp.concatenate([m[kx: kx + r2p, :] for kx in range(3)], axis=1)   # (r2p, 3C)
    p2 = jnp.concatenate(
        [m3[ky * wq: ky * wq + r2, :] for ky in range(3)], axis=1)          # (r2, 9C)
    acc2 = jax.lax.dot_general(
        w2_ref[...], p2,
        dimension_numbers=(((1,), (1,)), ((), ())),      # w2t @ p2.T
        preferred_element_type=jnp.float32)              # (C, r2)

    y2 = acc2 + b2_ref[...] + res_ref[0].astype(jnp.float32)   # bn2 shift + identity
    out_ref[0] = jnp.maximum(y2, 0.0).astype(out_ref.dtype)


def _bn_affine(gamma, beta, mean, var, eps=1e-5):
    scale = gamma / jnp.sqrt(var + eps)
    shift = beta - mean * scale
    return scale, shift


def init_basic_block_params(key, inplanes, planes):
    """Deterministic synthetic parameters matching BasicBlock.__init__ shapes."""
    k1, k2 = jax.random.split(key)
    w1 = jax.random.normal(k1, (planes, inplanes, 3, 3), jnp.float32) * 0.1
    w2 = jax.random.normal(k2, (planes, planes, 3, 3), jnp.float32) * 0.1
    c = jnp.arange(planes, dtype=jnp.float32)
    bn1 = (1.0 + 0.1 * c, 0.05 * c, 0.01 * c, 1.0 + 0.02 * c)   # gamma, beta, mean, var
    bn2 = (1.0 - 0.05 * c, -0.02 * c, 0.03 * c, 1.0 + 0.01 * c)
    return {"w1": w1, "bn1": bn1, "w2": w2, "bn2": bn2}


def basic_block_forward(x_nchw, params, *, compute_dtype=jnp.bfloat16):
    """BasicBlock.forward (eval-mode BN, stride=1, downsample=None). NCHW in/out."""
    N, Cin, H, W = x_nchw.shape
    planes, inplanes = params["w1"].shape[0], params["w1"].shape[1]
    assert inplanes == Cin and planes == inplanes, (
        "stride=1 / downsample=None BasicBlock requires inplanes == planes == C")
    C = planes

    Wq = _round_up(W + 3, 16)            # bf16 sublane tile = 16 rows
    assert Wq >= W + 3                   # left 2 + right >=1 padding kept in width
    lane_mult = 128 // math.gcd(Wq, 128)
    Hq = _round_up(H, lane_mult)         # keep Hq*Wq a multiple of 128 (lane-dense store)
    assert (Hq * Wq) % 128 == 0
    hb = Hq + 6

    s1, b1 = _bn_affine(*params["bn1"])
    s2, b2 = _bn_affine(*params["bn2"])

    def to_mat(w_oihw, scale):           # (O,I,3,3) * scale[o] -> (9*I, O), taps on K
        w = w_oihw * scale[:, None, None, None]
        return jnp.transpose(w, (2, 3, 1, 0)).reshape(9 * w_oihw.shape[1],
                                                      w_oihw.shape[0])

    w1m = to_mat(params["w1"], s1).astype(compute_dtype)            # (9*Cin, C)
    w2t = to_mat(params["w2"], s2).astype(compute_dtype).T          # (C, 9*C)
    b1v = b1.reshape(1, C).astype(jnp.float32)
    b2v = b2.reshape(C, 1).astype(jnp.float32)

    # NHWC, zero-padded once (top 2 / bottom Hq-H+4 rows, left 2 / right Wq-W cols),
    # then the three kx-shifted copies are stacked on the channel dim so every
    # in-kernel tap offset is a multiple of Wq.
    x_nhwc = jnp.transpose(x_nchw, (0, 2, 3, 1)).astype(compute_dtype)
    xbp = jnp.pad(x_nhwc, ((0, 0), (2, hb - H - 2), (2, Wq - W), (0, 0)))
    xb3 = jnp.concatenate([xbp[:, :, kx:kx + Wq, :] for kx in range(3)],
                          axis=-1)                                   # (N, hb, Wq, 3*Cin)

    # Identity, padded to (Hq, Wq), channels-major to match the output layout.
    res = jnp.pad(x_nchw.astype(compute_dtype),
                  ((0, 0), (0, 0), (0, Hq - H), (0, Wq - W))).reshape(N, C, Hq * Wq)

    kernel = functools.partial(_basic_block_kernel, H=H, W=W)

    out = pl.pallas_call(
        kernel,
        grid=(N,),
        in_specs=[
            pl.BlockSpec((1, hb, Wq, 3 * Cin), lambda n: (n, 0, 0, 0)),
            pl.BlockSpec((1, C, Hq * Wq), lambda n: (n, 0, 0)),
            # grid-invariant blocks (constant index_map -> DMA'd once)
            pl.BlockSpec((9 * Cin, C), lambda n: (0, 0)),
            pl.BlockSpec((1, C), lambda n: (0, 0)),
            pl.BlockSpec((C, 9 * C), lambda n: (0, 0)),
            pl.BlockSpec((C, 1), lambda n: (0, 0)),
        ],
        out_specs=pl.BlockSpec((1, C, Hq * Wq), lambda n: (n, 0, 0)),
        out_shape=jax.ShapeDtypeStruct((N, C, Hq * Wq), x_nchw.dtype),
        compiler_params=pltpu.CompilerParams(
            dimension_semantics=("parallel",),
            vmem_limit_bytes=32 * 1024 * 1024),
    )(xb3, res, w1m, b1v, w2t, b2v)

    # Drop padding; free reshape back to NCHW (no transpose of the output).
    return out.reshape(N, C, Hq, Wq)[:, :, :H, :W]


def _reference_forward(x_nchw, params, *, compute_dtype=jnp.bfloat16):
    """Pure-JAX reference mirroring the kernel's bf16 quantization points."""
    s1, b1 = _bn_affine(*params["bn1"])
    s2, b2 = _bn_affine(*params["bn2"])
    w1 = (params["w1"] * s1[:, None, None, None]).astype(compute_dtype)
    w2 = (params["w2"] * s2[:, None, None, None]).astype(compute_dtype)
    x = x_nchw.astype(compute_dtype)

    def conv(v, w):
        return jax.lax.conv_general_dilated(
            v, w, window_strides=(1, 1), padding=((1, 1), (1, 1)),
            dimension_numbers=("NCHW", "OIHW", "NCHW"),
            preferred_element_type=jnp.float32)

    out = conv(x, w1) + b1[None, :, None, None]
    out = jnp.maximum(out, 0.0).astype(compute_dtype)
    out = conv(out, w2) + b2[None, :, None, None]
    out = out + x.astype(jnp.float32)
    return jnp.maximum(out, 0.0).astype(x_nchw.dtype)


if __name__ == "__main__":
    key = jax.random.PRNGKey(0)
    kx, kp = jax.random.split(key)
    N, C, H, W = 2, 4, 16, 16      # inplanes == planes == 4 (residual shape-valid)
    x = jax.random.normal(kx, (N, C, H, W), jnp.float32)
    params = init_basic_block_params(kp, inplanes=C, planes=C)

    out = jax.jit(basic_block_forward)(x, params)
    out = jax.block_until_ready(out)

    ref = _reference_forward(x, params)
    assert out.shape == (N, C, H, W)
    assert out.dtype == x.dtype
    max_err = float(jnp.max(jnp.abs(out - ref)))
    assert jnp.allclose(out, ref, atol=2e-3, rtol=2e-2), (
        f"mismatch vs reference (max abs err {max_err})")
    print("KERNEL_OK")
</pallas_src>

<mosaic_0001>
module attributes {stable_mosaic.version = 11 : i64} {
  func.func @_basic_block_kernel(%arg0: i32, %arg1: memref<1x22x32x12xbf16, #tpu.memory_space<vmem>>, %arg2: memref<1x4x512xbf16, #tpu.memory_space<vmem>>, %arg3: memref<36x4xbf16, #tpu.memory_space<vmem>>, %arg4: memref<1x4xf32, #tpu.memory_space<vmem>>, %arg5: memref<4x36xbf16, #tpu.memory_space<vmem>>, %arg6: memref<4x1xf32, #tpu.memory_space<vmem>>, %arg7: memref<1x4x512xf32, #tpu.memory_space<vmem>>) attributes {dimension_semantics = [#tpu.dimension_semantics<parallel>], iteration_bounds = array<i64: 2>, scalar_prefetch = 0 : i64, scratch_operands = 0 : i64, tpu.core_type = #tpu.core_type<tc>, window_params = [{transform_indices = @transform_0, window_bounds = array<i64: 1, 22, 32, 12>}, {transform_indices = @transform_1, window_bounds = array<i64: 1, 4, 512>}, {pipeline_mode = #tpu.pipeline_mode<synchronous>, transform_indices = @transform_2, window_bounds = array<i64: 36, 4>}, {pipeline_mode = #tpu.pipeline_mode<synchronous>, transform_indices = @transform_3, window_bounds = array<i64: 1, 4>}, {pipeline_mode = #tpu.pipeline_mode<synchronous>, transform_indices = @transform_4, window_bounds = array<i64: 4, 36>}, {pipeline_mode = #tpu.pipeline_mode<synchronous>, transform_indices = @transform_5, window_bounds = array<i64: 4, 1>}, {transform_indices = @transform_6, window_bounds = array<i64: 1, 4, 512>}]} {
    %c0 = arith.constant 0 : index
    %c0_0 = arith.constant 0 : index
    %c0_1 = arith.constant 0 : index
    %c0_2 = arith.constant 0 : index
    %0 = vector.load %arg1[%c0, %c0_0, %c0_1, %c0_2] : memref<1x22x32x12xbf16, #tpu.memory_space<vmem>>, vector<1x22x32x12xbf16>
    %1 = vector.shape_cast %0 : vector<1x22x32x12xbf16> to vector<22x32x12xbf16>
    %2 = vector.shape_cast %1 : vector<22x32x12xbf16> to vector<704x12xbf16>
    %3 = vector.extract_strided_slice %2 {offsets = [0, 0], sizes = [608, 12], strides = [1, 1]} : vector<704x12xbf16> to vector<608x12xbf16>
    %4 = vector.extract_strided_slice %2 {offsets = [32, 0], sizes = [608, 12], strides = [1, 1]} : vector<704x12xbf16> to vector<608x12xbf16>
    %5 = vector.extract_strided_slice %2 {offsets = [64, 0], sizes = [608, 12], strides = [1, 1]} : vector<704x12xbf16> to vector<608x12xbf16>
    %6 = tpu.concatenate %3, %4, %5 in 1 : vector<608x12xbf16>, vector<608x12xbf16>, vector<608x12xbf16> -> vector<608x36xbf16>
    %c0_3 = arith.constant 0 : index
    %c0_4 = arith.constant 0 : index
    %7 = vector.load %arg3[%c0_3, %c0_4] : memref<36x4xbf16, #tpu.memory_space<vmem>>, vector<36x4xbf16>
    %cst = arith.constant dense<0.000000e+00> : vector<608x4xf32>
    %8 = tpu.matmul %6, %7, %cst {dimension_numbers = #tpu.dot_dimension_numbers<[1], [0], [0], [1], [0, 0, 1, 1], [], []>} : vector<608x36xbf16>, vector<36x4xbf16>, vector<608x4xf32> -> vector<608x4xf32>
    %c0_5 = arith.constant 0 : index
    %c0_6 = arith.constant 0 : index
    %9 = vector.load %arg4[%c0_5, %c0_6] : memref<1x4xf32, #tpu.memory_space<vmem>>, vector<1x4xf32>
    %10 = vector.broadcast %9 : vector<1x4xf32> to vector<608x4xf32>
    %11 = arith.addf %8, %10 : vector<608x4xf32>
    %cst_7 = arith.constant 0.000000e+00 : f32
    %12 = vector.broadcast %cst_7 : f32 to vector<608x4xf32>
    %13 = arith.maximumf %11, %12 : vector<608x4xf32>
    %14 = tpu.iota {dimensions = array<i32: 0>} : vector<608x1xi32>
    %c31_i32 = arith.constant 31 : i32
    %15 = vector.broadcast %c31_i32 : i32 to vector<608x1xi32>
    %16 = arith.andi %14, %15 : vector<608x1xi32>
    %c32_i32 = arith.constant 32 : i32
    %17 = vector.broadcast %c32_i32 : i32 to vector<608x1xi32>
    %18 = arith.cmpi sge, %14, %17 : vector<608x1xi32>
    %c544_i32 = arith.constant 544 : i32
    %19 = vector.broadcast %c544_i32 : i32 to vector<608x1xi32>
    %20 = arith.cmpi slt, %14, %19 : vector<608x1xi32>
    %21 = arith.andi %18, %20 : vector<608x1xi1>
    %c1_i32 = arith.constant 1 : i32
    %22 = vector.broadcast %c1_i32 : i32 to vector<608x1xi32>
    %23 = arith.cmpi sge, %16, %22 : vector<608x1xi32>
    %24 = arith.andi %21, %23 : vector<608x1xi1>
    %c16_i32 = arith.constant 16 : i32
    %25 = vector.broadcast %c16_i32 : i32 to vector<608x1xi32>
    %26 = arith.cmpi sle, %16, %25 : vector<608x1xi32>
    %27 = arith.andi %24, %26 : vector<608x1xi1>
    %cst_8 = arith.constant 0.000000e+00 : f32
    %28 = vector.shape_cast %27 : vector<608x1xi1> to vector<608x1xi1>
    %29 = vector.broadcast %28 : vector<608x1xi1> to vector<608x4xi1>
    %30 = vector.broadcast %cst_8 : f32 to vector<608x4xf32>
    %31 = arith.select %29, %13, %30 : vector<608x4xi1>, vector<608x4xf32>
    %32 = arith.truncf %31 : vector<608x4xf32> to vector<608x4xbf16>
    %33 = vector.extract_strided_slice %32 {offsets = [0, 0], sizes = [576, 4], strides = [1, 1]} : vector<608x4xbf16> to vector<576x4xbf16>
    %34 = vector.extract_strided_slice %32 {offsets = [1, 0], sizes = [576, 4], strides = [1, 1]} : vector<608x4xbf16> to vector<576x4xbf16>
    %35 = vector.extract_strided_slice %32 {offsets = [2, 0], sizes = [576, 4], strides = [1, 1]} : vector<608x4xbf16> to vector<576x4xbf16>
    %36 = tpu.concatenate %33, %34, %35 in 1 : vector<576x4xbf16>, vector<576x4xbf16>, vector<576x4xbf16> -> vector<576x12xbf16>
    %37 = vector.extract_strided_slice %36 {offsets = [0, 0], sizes = [512, 12], strides = [1, 1]} : vector<576x12xbf16> to vector<512x12xbf16>
    %38 = vector.extract_strided_slice %36 {offsets = [32, 0], sizes = [512, 12], strides = [1, 1]} : vector<576x12xbf16> to vector<512x12xbf16>
    %39 = vector.extract_strided_slice %36 {offsets = [64, 0], sizes = [512, 12], strides = [1, 1]} : vector<576x12xbf16> to vector<512x12xbf16>
    %40 = tpu.concatenate %37, %38, %39 in 1 : vector<512x12xbf16>, vector<512x12xbf16>, vector<512x12xbf16> -> vector<512x36xbf16>
    %c0_9 = arith.constant 0 : index
    %c0_10 = arith.constant 0 : index
    %41 = vector.load %arg5[%c0_9, %c0_10] : memref<4x36xbf16, #tpu.memory_space<vmem>>, vector<4x36xbf16>
    %cst_11 = arith.constant dense<0.000000e+00> : vector<4x512xf32>
    %42 = tpu.matmul %41, %40, %cst_11 {dimension_numbers = #tpu.dot_dimension_numbers<[1], [1], [0], [0], [0, 0, 1, 0], [], []>} : vector<4x36xbf16>, vector<512x36xbf16>, vector<4x512xf32> -> vector<4x512xf32>
    %c0_12 = arith.constant 0 : index
    %c0_13 = arith.constant 0 : index
    %43 = vector.load %arg6[%c0_12, %c0_13] : memref<4x1xf32, #tpu.memory_space<vmem>>, vector<4x1xf32>
    %44 = vector.broadcast %43 : vector<4x1xf32> to vector<4x512xf32>
    %45 = arith.addf %42, %44 : vector<4x512xf32>
    %c0_14 = arith.constant 0 : index
    %c0_15 = arith.constant 0 : index
    %c0_16 = arith.constant 0 : index
    %46 = vector.load %arg2[%c0_14, %c0_15, %c0_16] : memref<1x4x512xbf16, #tpu.memory_space<vmem>>, vector<1x4x512xbf16>
    %47 = vector.shape_cast %46 : vector<1x4x512xbf16> to vector<4x512xbf16>
    %48 = arith.extf %47 : vector<4x512xbf16> to vector<4x512xf32>
    %49 = arith.addf %45, %48 : vector<4x512xf32>
    %cst_17 = arith.constant 0.000000e+00 : f32
    %50 = vector.broadcast %cst_17 : f32 to vector<4x512xf32>
    %51 = arith.maximumf %49, %50 : vector<4x512xf32>
    %c0_18 = arith.constant 0 : index
    %c0_19 = arith.constant 0 : index
    %c0_20 = arith.constant 0 : index
    %52 = vector.load %arg7[%c0_18, %c0_19, %c0_20] : memref<1x4x512xf32, #tpu.memory_space<vmem>>, vector<1x4x512xf32>
    %53 = vector.shape_cast %52 : vector<1x4x512xf32> to vector<4x512xf32>
    %54 = vector.shape_cast %51 : vector<4x512xf32> to vector<1x4x512xf32>
    tpu.vector_store %arg7[%c0_18, %c0_19, %c0_20], %54 {strides = array<i32>} : memref<1x4x512xf32, #tpu.memory_space<vmem>>, vector<1x4x512xf32>,
    return
  }
  func.func @transform_0(%arg0: i32) -> (i32, i32, i32, i32) {
    %c0_i32 = arith.constant 0 : i32
    %c0_i32_0 = arith.constant 0 : i32
    %c0_i32_1 = arith.constant 0 : i32
    %c0_i32_2 = arith.constant 0 : i32
    return %arg0, %c0_i32, %c0_i32_0, %c0_i32_1 : i32, i32, i32, i32
  }
  func.func @transform_1(%arg0: i32) -> (i32, i32, i32) {
    %c0_i32 = arith.constant 0 : i32
    %c0_i32_0 = arith.constant 0 : i32
    %c0_i32_1 = arith.constant 0 : i32
    return %arg0, %c0_i32, %c0_i32_0 : i32, i32, i32
  }
  func.func @transform_2(%arg0: i32) -> (i32, i32) {
    %c0_i32 = arith.constant 0 : i32
    %c0_i32_0 = arith.constant 0 : i32
    %c0_i32_1 = arith.constant 0 : i32
    return %c0_i32, %c0_i32_0 : i32, i32
  }
  func.func @transform_3(%arg0: i32) -> (i32, i32) {
    %c0_i32 = arith.constant 0 : i32
    %c0_i32_0 = arith.constant 0 : i32
    %c0_i32_1 = arith.constant 0 : i32
    return %c0_i32, %c0_i32_0 : i32, i32
  }
  func.func @transform_4(%arg0: i32) -> (i32, i32) {
    %c0_i32 = arith.constant 0 : i32
    %c0_i32_0 = arith.constant 0 : i32
    %c0_i32_1 = arith.constant 0 : i32
    return %c0_i32, %c0_i32_0 : i32, i32
  }
  func.func @transform_5(%arg0: i32) -> (i32, i32) {
    %c0_i32 = arith.constant 0 : i32
    %c0_i32_0 = arith.constant 0 : i32
    %c0_i32_1 = arith.constant 0 : i32
    return %c0_i32, %c0_i32_0 : i32, i32
  }
  func.func @transform_6(%arg0: i32) -> (i32, i32, i32) {
    %c0_i32 = arith.constant 0 : i32
    %c0_i32_0 = arith.constant 0 : i32
    %c0_i32_1 = arith.constant 0 : i32
    return %arg0, %c0_i32, %c0_i32_0 : i32, i32, i32
  }
}

</mosaic_0001>

<llo_original>
// kernel: basic_block_forward.1
$region0: #{basic_block_forward.1}
  #allocation0 [shape = 'u32[]', space=smem, size = 0x4, offset = 0x4, fixed_abs, tag = 'smem constant byte address 0x4 - core index']
  #allocation1 [shape = 'u32[72,128]{1,0:T(1,128)}', space=vmem, size = 0x9000, scoped, tag = 'internal scratch']
  %s0 = inlined_call_operand.vmem [shape: bf16[2,22,32,12], index: 0, kind: input, shape index: {}]
  %s1 = inlined_call_operand.vmem [shape: bf16[2,4,512], index: 1, kind: input, shape index: {}]
  %s2 = inlined_call_operand.vmem [shape: bf16[36,4], index: 2, kind: input, shape index: {}]
  %s3 = inlined_call_operand.vmem [shape: f32[1,4], index: 3, kind: input, shape index: {}]
  %s4 = inlined_call_operand.vmem [shape: bf16[4,36], index: 4, kind: input, shape index: {}]
  %s5 = inlined_call_operand.vmem [shape: f32[4,1], index: 5, kind: input, shape index: {}]
  %s6 = inlined_call_operand.vmem [shape: f32[2,4,512], index: 6, kind: output, shape index: {}]
  %s7 = sld [smem:[#allocation0]]
  $region57: #{basic_block_forward.1} parent=0
    _
  %s9 = ssub.s32 1, %s7
  %s10 = scalar_select 0, %s9, %s7
  loop: start=0, step=1, limit=4
  $region2: #{basic_block_forward.1} parent=0 // loop_pre_header
    _
  $region3: #{basic_block_forward.1} parent=0 // loop_header
    %s12 = sphi 0, %s16
    %p13 = scmp.ge.s32.totalorder %s12, 4
    %s22 = sphi 0, %s24
    %s25 = sphi 0, %s22
    %s26 = sphi 0, %s25
    %s42 = sphi 0, %s26
    %s48 = sphi 0, %s50
    %s51 = sphi 0, %s48
    %s52 = sphi 0, %s51
    %s68 = sphi 0, %s52
    %s72 = sphi 0, %s72
    %s74 = sphi 0, %s72
    %s75 = sphi 0, %s74
    %s89 = sphi 0, %s75
    %s93 = sphi 0, %s93
    %s95 = sphi 0, %s93
    %s96 = sphi 0, %s95
    %s110 = sphi 0, %s96
    %s114 = sphi 0, %s114
    %s116 = sphi 0, %s114
    %s117 = sphi 0, %s116
    %s131 = sphi 0, %s117
    %s135 = sphi 0, %s135
    %s137 = sphi 0, %s135
    %s138 = sphi 0, %s137
    %s152 = sphi 0, %s138
    %s158 = sphi 0, %s160
    %s161 = sphi 0, %s158
    %s162 = sphi 0, %s161
    %s178 = sphi 0, %s162
  $region4: #{basic_block_forward.1} parent=0 // loop_header_branch
    %15 = sbr.rel (%p13) target = $region8
  $region5: #{basic_block_forward.1} parent=0 // loop_body
    %s17 = ssub.s32 %s12, 1
    %s18 = ssub.s32 %s12, 2
    %s19 = sadd.s32 %s12, 1
    %s20 = ssub.s32 %s12, %s19
    %p21 = scmp.eq.s32.totalorder %s20, 0
    %s23 = sadd.s32 %s22, 1
    %s24 = scalar_select %p21, %s22, %s23
    %p27 = pneg %p21
    %p28 = scmp.eq.s32.totalorder %s12, 1
    %p29 = por %p27, %p28
    %p30 = scmp.ne.s32.totalorder %s22, %s25
    %p31 = scmp.eq.s32.totalorder %s12, 0
    %p32 = por %p30, %p31
    %p33 = scmp.ne.s32.totalorder %s22, %s25
    %p34 = scmp.eq.s32.totalorder %s17, 1
    %p35 = por %p33, %p34
    %p36 = scmp.ne.s32.totalorder %s25, %s26
    %p37 = scmp.eq.s32.totalorder %s17, 0
    %p38 = por %p36, %p37
    %p39 = scmp.ne.s32.totalorder %s25, %s26
    %p40 = scmp.eq.s32.totalorder %s18, 1
    %p41 = por %p39, %p40
    %p43 = scmp.ne.s32.totalorder %s26, %s42
    %p44 = scmp.eq.s32.totalorder %s18, 0
    %p45 = por %p43, %p44
    %s46 = ssub.s32 %s12, %s19
    %p47 = scmp.eq.s32.totalorder %s46, 0
    %s49 = sadd.s32 %s48, 1
    %s50 = scalar_select %p47, %s48, %s49
    %p53 = pneg %p47
    %p54 = scmp.eq.s32.totalorder %s12, 1
    %p55 = por %p53, %p54
    %p56 = scmp.ne.s32.totalorder %s48, %s51
    %p57 = scmp.eq.s32.totalorder %s12, 0
    %p58 = por %p56, %p57
    %p59 = scmp.ne.s32.totalorder %s48, %s51
    %p60 = scmp.eq.s32.totalorder %s17, 1
    %p61 = por %p59, %p60
    %p62 = scmp.ne.s32.totalorder %s51, %s52
    %p63 = scmp.eq.s32.totalorder %s17, 0
    %p64 = por %p62, %p63
    %p65 = scmp.ne.s32.totalorder %s51, %s52
    %p66 = scmp.eq.s32.totalorder %s18, 1
    %p67 = por %p65, %p66
    %p69 = scmp.ne.s32.totalorder %s52, %s68
    %p70 = scmp.eq.s32.totalorder %s18, 0
    %p71 = por %p69, %p70
    %s73 = sadd.s32 %s72, 1
    %p76 = scmp.eq.s32.totalorder %s12, 1
    %p77 = scmp.ne.s32.totalorder %s72, %s74
    %p78 = scmp.eq.s32.totalorder %s12, 0
    %p79 = por %p77, %p78
    %p80 = scmp.ne.s32.totalorder %s72, %s74
    %p81 = scmp.eq.s32.totalorder %s17, 1
    %p82 = por %p80, %p81
    %p83 = scmp.ne.s32.totalorder %s74, %s75
    %p84 = scmp.eq.s32.totalorder %s17, 0
    %p85 = por %p83, %p84
    %p86 = scmp.ne.s32.totalorder %s74, %s75
    %p87 = scmp.eq.s32.totalorder %s18, 1
    %p88 = por %p86, %p87
    %p90 = scmp.ne.s32.totalorder %s75, %s89
    %p91 = scmp.eq.s32.totalorder %s18, 0
    %p92 = por %p90, %p91
    %s94 = sadd.s32 %s93, 1
    %p97 = scmp.eq.s32.totalorder %s12, 1
    %p98 = scmp.ne.s32.totalorder %s93, %s95
    %p99 = scmp.eq.s32.totalorder %s12, 0
    %p100 = por %p98, %p99
    %p101 = scmp.ne.s32.totalorder %s93, %s95
    %p102 = scmp.eq.s32.totalorder %s17, 1
    %p103 = por %p101, %p102
    %p104 = scmp.ne.s32.totalorder %s95, %s96
    %p105 = scmp.eq.s32.totalorder %s17, 0
    %p106 = por %p104, %p105
    %p107 = scmp.ne.s32.totalorder %s95, %s96
    %p108 = scmp.eq.s32.totalorder %s18, 1
    %p109 = por %p107, %p108
    %p111 = scmp.ne.s32.totalorder %s96, %s110
    %p112 = scmp.eq.s32.totalorder %s18, 0
    %p113 = por %p111, %p112
    %s115 = sadd.s32 %s114, 1
    %p118 = scmp.eq.s32.totalorder %s12, 1
    %p119 = scmp.ne.s32.totalorder %s114, %s116
    %p120 = scmp.eq.s32.totalorder %s12, 0
    %p121 = por %p119, %p120
    %p122 = scmp.ne.s32.totalorder %s114, %s116
    %p123 = scmp.eq.s32.totalorder %s17, 1
    %p124 = por %p122, %p123
    %p125 = scmp.ne.s32.totalorder %s116, %s117
    %p126 = scmp.eq.s32.totalorder %s17, 0
    %p127 = por %p125, %p126
    %p128 = scmp.ne.s32.totalorder %s116, %s117
    %p129 = scmp.eq.s32.totalorder %s18, 1
    %p130 = por %p128, %p129
    %p132 = scmp.ne.s32.totalorder %s117, %s131
    %p133 = scmp.eq.s32.totalorder %s18, 0
    %p134 = por %p132, %p133
    %s136 = sadd.s32 %s135, 1
    %p139 = scmp.eq.s32.totalorder %s12, 1
    %p140 = scmp.ne.s32.totalorder %s135, %s137
    %p141 = scmp.eq.s32.totalorder %s12, 0
    %p142 = por %p140, %p141
    %p143 = scmp.ne.s32.totalorder %s135, %s137
    %p144 = scmp.eq.s32.totalorder %s17, 1
    %p145 = por %p143, %p144
    %p146 = scmp.ne.s32.totalorder %s137, %s138
    %p147 = scmp.eq.s32.totalorder %s17, 0
    %p148 = por %p146, %p147
    %p149 = scmp.ne.s32.totalorder %s137, %s138
    %p150 = scmp.eq.s32.totalorder %s18, 1
    %p151 = por %p149, %p150
    %p153 = scmp.ne.s32.totalorder %s138, %s152
    %p154 = scmp.eq.s32.totalorder %s18, 0
    %p155 = por %p153, %p154
    %s156 = ssub.s32 %s12, %s19
    %p157 = scmp.eq.s32.totalorder %s156, 0
    %s159 = sadd.s32 %s158, 1
    %s160 = scalar_select %p157, %s158, %s159
    %p163 = pneg %p157
    %p164 = scmp.eq.s32.totalorder %s12, 1
    %p165 = por %p163, %p164
    %p166 = scmp.ne.s32.totalorder %s158, %s161
    %p167 = scmp.eq.s32.totalorder %s12, 0
    %p168 = por %p166, %p167
    %p169 = scmp.ne.s32.totalorder %s158, %s161
    %p170 = scmp.eq.s32.totalorder %s17, 1
    %p171 = por %p169, %p170
    %p172 = scmp.ne.s32.totalorder %s161, %s162
    %p173 = scmp.eq.s32.totalorder %s17, 0
    %p174 = por %p172, %p173
    %p175 = scmp.ne.s32.totalorder %s161, %s162
    %p176 = scmp.eq.s32.totalorder %s18, 1
    %p177 = por %p175, %p176
    %p179 = scmp.ne.s32.totalorder %s162, %s178
    %p180 = scmp.eq.s32.totalorder %s18, 0
    %p181 = por %p179, %p180
    %p182 = scmp.le.s32.totalorder 1, %s12
    %p183 = scmp.lt.s32.totalorder %s12, 3
    %p184 = pnand %p182, %p183
    %p185 = pneg %p184
    // Predicated region
    $region9: #{basic_block_forward.1} parent=5 // pred_check
      _
    $region10: #{basic_block_forward.1} parent=5 // pred_check_branch
      %187 = sbr.rel (%p184) target = $region12
    $region11: #{basic_block_forward.1} parent=5 // pred_region
      %s188 = ssub.s32 %s12, 1
      // Predicated region
      $region13: #{basic_block_forward.1} parent=11 // pred_check
        %p189 = pneg %p85
      $region14: #{basic_block_forward.1} parent=11 // pred_check_branch
        %191 = sbr.rel (%p189) target = $region16
      $region15: #{basic_block_forward.1} parent=11 // pred_region
        _
      $region16: #{basic_block_forward.1} parent=11 // pred_fallthru
        _
      // Predicated region
      $region17: #{basic_block_forward.1} parent=11 // pred_check
        %p192 = pneg %p106
      $region18: #{basic_block_forward.1} parent=11 // pred_check_branch
        %194 = sbr.rel (%p192) target = $region20
      $region19: #{basic_block_forward.1} parent=11 // pred_region
        _
      $region20: #{basic_block_forward.1} parent=11 // pred_fallthru
        _
      // Predicated region
      $region21: #{basic_block_forward.1} parent=11 // pred_check
        %p195 = pneg %p127
      $region22: #{basic_block_forward.1} parent=11 // pred_check_branch
        %197 = sbr.rel (%p195) target = $region24
      $region23: #{basic_block_forward.1} parent=11 // pred_region
        _
      $region24: #{basic_block_forward.1} parent=11 // pred_fallthru
        _
      // Predicated region
      $region25: #{basic_block_forward.1} parent=11 // pred_check
        %p198 = pneg %p148
      $region26: #{basic_block_forward.1} parent=11 // pred_check_branch
        %200 = sbr.rel (%p198) target = $region28
      $region27: #{basic_block_forward.1} parent=11 // pred_region
        _
      $region28: #{basic_block_forward.1} parent=11 // pred_fallthru
        _
    $region12: #{basic_block_forward.1} parent=5 // pred_fallthru
      _
    %p201 = scmp.lt.s32.totalorder %s12, 2
    // Predicated region
    $region29: #{basic_block_forward.1} parent=5 // pred_check
      %p202 = pneg %p201
    $region30: #{basic_block_forward.1} parent=5 // pred_check_branch
      %204 = sbr.rel (%p202) target = $region32
    $region31: #{basic_block_forward.1} parent=5 // pred_region
      // Predicated region
      $region33: #{basic_block_forward.1} parent=31 // pred_check
        %p205 = pneg %p32
      $region34: #{basic_block_forward.1} parent=31 // pred_check_branch
        %207 = sbr.rel (%p205) target = $region36
      $region35: #{basic_block_forward.1} parent=31 // pred_region
        %p208 = scmp.lt.s32.totalorder %s12, 1
        %s209 = scalar_select %p208, %s12, 1
        %s210 = smul.addr %s209, 88
        %s211 = smul.addr %s210, 4
        %s212 = scalar_lea.vmem %s0, %s211
      $region36: #{basic_block_forward.1} parent=31 // pred_fallthru
        _
      // Predicated region
      $region37: #{basic_block_forward.1} parent=31 // pred_check
        %p213 = pneg %p58
      $region38: #{basic_block_forward.1} parent=31 // pred_check_branch
        %215 = sbr.rel (%p213) target = $region40
      $region39: #{basic_block_forward.1} parent=31 // pred_region
        %p216 = scmp.lt.s32.totalorder %s12, 1
        %s217 = scalar_select %p216, %s12, 1
        %s218 = smul.addr %s217, 4
        %s219 = smul.addr %s218, 2
        %s220 = scalar_lea.vmem %s1, %s219
      $region40: #{basic_block_forward.1} parent=31 // pred_fallthru
        _
    $region32: #{basic_block_forward.1} parent=5 // pred_fallthru
      _
    %p221 = scmp.le.s32.totalorder 1, %s12
    %p222 = scmp.lt.s32.totalorder %s12, 3
    %p223 = pnand %p221, %p222
    %p224 = pneg %p223
    // Predicated region
    $region41: #{basic_block_forward.1} parent=5 // pred_check
      _
    $region42: #{basic_block_forward.1} parent=5 // pred_check_branch
      %226 = sbr.rel (%p223) target = $region44
    $region43: #{basic_block_forward.1} parent=5 // pred_region
      %s227 = ssub.s32 %s12, 1
      %p228 = scmp.lt.s32.totalorder %s17, 1
      %s229 = scalar_select %p228, %s17, 1
      %s230 = smul.addr %s229, 88
      %s231 = smul.addr %s230, 4
      %s232 = scalar_lea.vmem %s0, %s231
      %p233 = pneg %p38
      %p234 = pneg %p35
      %p235 = scmp.lt.s32.totalorder %s17, 1
      %s236 = scalar_select %p235, %s17, 1
      %s237 = smul.addr %s236, 4
      %s238 = smul.addr %s237, 2
      %s239 = scalar_lea.vmem %s1, %s238
      %p240 = pneg %p64
      %p241 = pneg %p61
      %p242 = pneg %p85
      %p243 = pneg %p82
      %p244 = pneg %p106
      %p245 = pneg %p103
      %p246 = pneg %p127
      %p247 = pneg %p124
      %p248 = pneg %p148
      %p249 = pneg %p145
      %p250 = pneg %p174
      %p251 = pneg %p171
      %p252 = scmp.lt.s32.totalorder %s17, 1
      %s253 = scalar_select %p252, %s17, 1
      %s254 = smul.addr %s253, 4
      %s255 = smul.addr %s254, 4
      %s256 = scalar_lea.vmem %s6, %s255
      %p257 = scmp.lt.s32.totalorder %s17, 1
      %s258 = scalar_select %p257, %s17, 1
      %s259 = smul.addr %s258, 88
      %s260 = smul.addr %s259, 4
      %s261 = scalar_lea.vmem %s0, %s260
      %p262 = scmp.lt.s32.totalorder %s17, 1
      %s263 = scalar_select %p262, %s17, 1
      %s264 = smul.addr %s263, 4
      %s265 = smul.addr %s264, 2
      %s266 = scalar_lea.vmem %s1, %s265
      %p267 = scmp.lt.s32.totalorder %s17, 1
      %s268 = scalar_select %p267, %s17, 1
      %s269 = smul.addr %s268, 4
      %s270 = smul.addr %s269, 4
      %s271 = scalar_lea.vmem %s6, %s270
      %v273 = vld [vmem:[%s261] sm:$0xf]
      %v274 = vld [vmem:[%s261 + $0x4] sm:$0xf]
      %v275 = vld [vmem:[%s261 + $0x8] sm:$0xf]
      %v276 = vld [vmem:[%s261 + $0xc] sm:$0xf]
      %v277 = vld [vmem:[%s261 + $0x10] sm:$0xf]
      %v278 = vld [vmem:[%s261 + $0x14] sm:$0xf]
      %v279 = vld [vmem:[%s261 + $0x18] sm:$0xf]
      %v280 = vld [vmem:[%s261 + $0x1c] sm:$0xf]
      %v281 = vld [vmem:[%s261 + $0x20] sm:$0xf]
      %v282 = vld [vmem:[%s261 + $0x24] sm:$0xf]
      %v283 = vld [vmem:[%s261 + $0x28] sm:$0xf]
      %v284 = vld [vmem:[%s261 + $0x2c] sm:$0xf]
      %v285 = vld [vmem:[%s261 + $0x30] sm:$0xf]
      %v286 = vld [vmem:[%s261 + $0x34] sm:$0xf]
      %v287 = vld [vmem:[%s261 + $0x38] sm:$0xf]
      %v288 = vld [vmem:[%s261 + $0x3c] sm:$0xf]
      %v289 = vld [vmem:[%s261 + $0x40] sm:$0xf]
      %v290 = vld [vmem:[%s261 + $0x44] sm:$0xf]
      %v291 = vld [vmem:[%s261 + $0x48] sm:$0xf]
      %v292 = vld [vmem:[%s261 + $0x4c] sm:$0xf]
      %v293 = vld [vmem:[%s261 + $0x50] sm:$0xf]
      %v294 = vld [vmem:[%s261 + $0x54] sm:$0xf]
      %v295 = vld [vmem:[%s261 + $0x58] sm:$0xf]
      %v296 = vld [vmem:[%s261 + $0x5c] sm:$0xf]
      %v297 = vld [vmem:[%s261 + $0x60] sm:$0xf]
      %v298 = vld [vmem:[%s261 + $0x64] sm:$0xf]
      %v299 = vld [vmem:[%s261 + $0x68] sm:$0xf]
      %v300 = vld [vmem:[%s261 + $0x6c] sm:$0xf]
      %v301 = vld [vmem:[%s261 + $0x70] sm:$0xf]
      %v302 = vld [vmem:[%s261 + $0x74] sm:$0xf]
      %v303 = vld [vmem:[%s261 + $0x78] sm:$0xf]
      %v304 = vld [vmem:[%s261 + $0x7c] sm:$0xf]
      %v305 = vld [vmem:[%s261 + $0x80] sm:$0xf]
      %v306 = vld [vmem:[%s261 + $0x84] sm:$0xf]
      %v307 = vld [vmem:[%s261 + $0x88] sm:$0xf]
      %v308 = vld [vmem:[%s261 + $0x8c] sm:$0xf]
      %v309 = vld [vmem:[%s261 + $0x90] sm:$0xf]
      %v310 = vld [vmem:[%s261 + $0x94] sm:$0xf]
      %v311 = vld [vmem:[%s261 + $0x98] sm:$0xf]
      %v312 = vld [vmem:[%s261 + $0x9c] sm:$0xf]
      %v313 = vld [vmem:[%s261 + $0xa0] sm:$0xf]
      %v314 = vld [vmem:[%s261 + $0xa4] sm:$0xf]
      %v315 = vld [vmem:[%s261 + $0xa8] sm:$0xf]
      %v316 = vld [vmem:[%s261 + $0xac] sm:$0xf]
      %v317 = vld [vmem:[%s261 + $0xb0] sm:$0xf]
      %v318 = vld [vmem:[%s261 + $0xb4] sm:$0xf]
      %v319 = vld [vmem:[%s261 + $0xb8] sm:$0xf]
      %v320 = vld [vmem:[%s261 + $0xbc] sm:$0xf]
      %v321 = vld [vmem:[%s261 + $0xc0] sm:$0xf]
      %v322 = vld [vmem:[%s261 + $0xc4] sm:$0xf]
      %v323 = vld [vmem:[%s261 + $0xc8] sm:$0xf]
      %v324 = vld [vmem:[%s261 + $0xcc] sm:$0xf]
      %v325 = vld [vmem:[%s261 + $0xd0] sm:$0xf]
      %v326 = vld [vmem:[%s261 + $0xd4] sm:$0xf]
      %v327 = vld [vmem:[%s261 + $0xd8] sm:$0xf]
      %v328 = vld [vmem:[%s261 + $0xdc] sm:$0xf]
      %v329 = vld [vmem:[%s261 + $0xe0] sm:$0xf]
      %v330 = vld [vmem:[%s261 + $0xe4] sm:$0xf]
      %v331 = vld [vmem:[%s261 + $0xe8] sm:$0xf]
      %v332 = vld [vmem:[%s261 + $0xec] sm:$0xf]
      %v333 = vld [vmem:[%s261 + $0xf0] sm:$0xf]
      %v334 = vld [vmem:[%s261 + $0xf4] sm:$0xf]
      %v335 = vld [vmem:[%s261 + $0xf8] sm:$0xf]
      %v336 = vld [vmem:[%s261 + $0xfc] sm:$0xf]
      %v337 = vld [vmem:[%s261 + $0x100] sm:$0xf]
      %v338 = vld [vmem:[%s261 + $0x104] sm:$0xf]
      %v339 = vld [vmem:[%s261 + $0x108] sm:$0xf]
      %v340 = vld [vmem:[%s261 + $0x10c] sm:$0xf]
      %v341 = vld [vmem:[%s261 + $0x110] sm:$0xf]
      %v342 = vld [vmem:[%s261 + $0x114] sm:$0xf]
      %v343 = vld [vmem:[%s261 + $0x118] sm:$0xf]
      %v344 = vld [vmem:[%s261 + $0x11c] sm:$0xf]
      %v345 = vld [vmem:[%s261 + $0x120] sm:$0xf]
      %v346 = vld [vmem:[%s261 + $0x124] sm:$0xf]
      %v347 = vld [vmem:[%s261 + $0x128] sm:$0xf]
      %v348 = vld [vmem:[%s261 + $0x12c] sm:$0xf]
      %v349 = vld [vmem:[%s261 + $0x130] sm:$0xf]
      %v350 = vld [vmem:[%s261 + $0x134] sm:$0xf]
      %v351 = vld [vmem:[%s261 + $0x138] sm:$0xf]
      %v352 = vld [vmem:[%s261 + $0x13c] sm:$0xf]
      %v353 = vld [vmem:[%s261 + $0x140] sm:$0xf]
      %v354 = vld [vmem:[%s261 + $0x144] sm:$0xf]
      %v355 = vld [vmem:[%s261 + $0x148] sm:$0xf]
      %v356 = vld [vmem:[%s261 + $0x14c] sm:$0xf]
      %v433 = vunpack.c.l.b16 %v273
      %v434 = vunpack.c.l.b16 %v274
      %v435 = vunpack.c.l.b16 %v275
      %v436 = vunpack.c.l.b16 %v276
      %v437 = vunpack.c.l.b16 %v277
      %v438 = vunpack.c.l.b16 %v278
      %v439 = vunpack.c.l.b16 %v279
      %v440 = vunpack.c.l.b16 %v280
      %v441 = vunpack.c.l.b16 %v281
      %v442 = vunpack.c.l.b16 %v282
      %v443 = vunpack.c.l.b16 %v283
      %v444 = vunpack.c.l.b16 %v284
      %v445 = vunpack.c.l.b16 %v285
      %v446 = vunpack.c.l.b16 %v286
      %v447 = vunpack.c.l.b16 %v287
      %v448 = vunpack.c.l.b16 %v288
      %v449 = vunpack.c.l.b16 %v289
      %v450 = vunpack.c.l.b16 %v290
      %v451 = vunpack.c.l.b16 %v291
      %v452 = vunpack.c.l.b16 %v292
      %v453 = vunpack.c.l.b16 %v293
      %v454 = vunpack.c.l.b16 %v294
      %v455 = vunpack.c.l.b16 %v295
      %v456 = vunpack.c.l.b16 %v296
      %v457 = vunpack.c.l.b16 %v297
      %v458 = vunpack.c.l.b16 %v298
      %v459 = vunpack.c.l.b16 %v299
      %v460 = vunpack.c.l.b16 %v300
      %v461 = vunpack.c.l.b16 %v301
      %v462 = vunpack.c.l.b16 %v302
      %v463 = vunpack.c.l.b16 %v303
      %v464 = vunpack.c.l.b16 %v304
      %v465 = vunpack.c.l.b16 %v305
      %v466 = vunpack.c.l.b16 %v306
      %v467 = vunpack.c.l.b16 %v307
      %v468 = vunpack.c.l.b16 %v308
      %v469 = vunpack.c.l.b16 %v309
      %v470 = vunpack.c.l.b16 %v310
      %v471 = vunpack.c.l.b16 %v311
      %v472 = vunpack.c.l.b16 %v312
      %v473 = vunpack.c.l.b16 %v313
      %v474 = vunpack.c.l.b16 %v314
      %v475 = vunpack.c.l.b16 %v315
      %v476 = vunpack.c.l.b16 %v316
      %v477 = vunpack.c.l.b16 %v317
      %v478 = vunpack.c.l.b16 %v318
      %v479 = vunpack.c.l.b16 %v319
      %v480 = vunpack.c.l.b16 %v320
      %v481 = vunpack.c.l.b16 %v321
      %v482 = vunpack.c.l.b16 %v322
      %v483 = vunpack.c.l.b16 %v323
      %v484 = vunpack.c.l.b16 %v324
      %v485 = vunpack.c.l.b16 %v325
      %v486 = vunpack.c.l.b16 %v326
      %v487 = vunpack.c.l.b16 %v327
      %v488 = vunpack.c.l.b16 %v328
      %v489 = vunpack.c.l.b16 %v329
      %v490 = vunpack.c.l.b16 %v330
      %v491 = vunpack.c.l.b16 %v331
      %v492 = vunpack.c.l.b16 %v332
      %v493 = vunpack.c.l.b16 %v333
      %v494 = vunpack.c.l.b16 %v334
      %v495 = vunpack.c.l.b16 %v335
      %v496 = vunpack.c.l.b16 %v336
      %v497 = vunpack.c.l.b16 %v337
      %v498 = vunpack.c.l.b16 %v338
      %v499 = vunpack.c.l.b16 %v339
      %v500 = vunpack.c.l.b16 %v340
      %v501 = vunpack.c.l.b16 %v341
      %v502 = vunpack.c.l.b16 %v342
      %v503 = vunpack.c.l.b16 %v343
      %v504 = vunpack.c.l.b16 %v344
      %v505 = vunpack.c.l.b16 %v345
      %v506 = vunpack.c.l.b16 %v346
      %v507 = vunpack.c.l.b16 %v347
      %v508 = vunpack.c.l.b16 %v348
      %v509 = vpack.c.b16 %v434, %v433
      %v510 = vpack.c.b16 %v436, %v435
      %v511 = vpack.c.b16 %v438, %v437
      %v512 = vpack.c.b16 %v440, %v439
      %v513 = vpack.c.b16 %v442, %v441
      %v514 = vpack.c.b16 %v444, %v443
      %v515 = vpack.c.b16 %v446, %v445
      %v516 = vpack.c.b16 %v448, %v447
      %v517 = vpack.c.b16 %v450, %v449
      %v518 = vpack.c.b16 %v452, %v451
      %v519 = vpack.c.b16 %v454, %v453
      %v520 = vpack.c.b16 %v456, %v455
      %v521 = vpack.c.b16 %v458, %v457
      %v522 = vpack.c.b16 %v460, %v459
      %v523 = vpack.c.b16 %v462, %v461
      %v524 = vpack.c.b16 %v464, %v463
      %v525 = vpack.c.b16 %v466, %v465
      %v526 = vpack.c.b16 %v468, %v467
      %v527 = vpack.c.b16 %v470, %v469
      %v528 = vpack.c.b16 %v472, %v471
      %v529 = vpack.c.b16 %v474, %v473
      %v530 = vpack.c.b16 %v476, %v475
      %v531 = vpack.c.b16 %v478, %v477
      %v532 = vpack.c.b16 %v480, %v479
      %v533 = vpack.c.b16 %v482, %v481
      %v534 = vpack.c.b16 %v484, %v483
      %v535 = vpack.c.b16 %v486, %v485
      %v536 = vpack.c.b16 %v488, %v487
      %v537 = vpack.c.b16 %v490, %v489
      %v538 = vpack.c.b16 %v492, %v491
      %v539 = vpack.c.b16 %v494, %v493
      %v540 = vpack.c.b16 %v496, %v495
      %v541 = vpack.c.b16 %v498, %v497
      %v542 = vpack.c.b16 %v500, %v499
      %v543 = vpack.c.b16 %v502, %v501
      %v544 = vpack.c.b16 %v504, %v503
      %v545 = vpack.c.b16 %v506, %v505
      %v546 = vpack.c.b16 %v508, %v507
      %v551 = vunpack.c.l.b16 %v349
      %v552 = vunpack.c.l.b16 %v350
      %v553 = vunpack.c.l.b16 %v351
      %v554 = vunpack.c.l.b16 %v352
      %v555 = vpack.c.b16 %v552, %v551
      %v556 = vpack.c.b16 %v554, %v553
      %557 = vrot.lane.b32.xlu0 %v511, 12
      %v558 = vpop.permute.xlu0 %557
      %559 = vrot.lane.b32.xlu0 %v512, 12
      %v560 = vpop.permute.xlu0 %559
      %561 = vrot.lane.b32.xlu0 %v513, 12
      %v562 = vpop.permute.xlu0 %561
      %563 = vrot.lane.b32.xlu0 %v514, 12
      %v564 = vpop.permute.xlu0 %563
      %565 = vrot.lane.b32.xlu0 %v515, 12
      %v566 = vpop.permute.xlu0 %565
      %567 = vrot.lane.b32.xlu0 %v516, 12
      %v568 = vpop.permute.xlu0 %567
      %569 = vrot.lane.b32.xlu0 %v517, 12
      %v570 = vpop.permute.xlu0 %569
      %571 = vrot.lane.b32.xlu0 %v518, 12
      %v572 = vpop.permute.xlu0 %571
      %573 = vrot.lane.b32.xlu0 %v519, 12
      %v574 = vpop.permute.xlu0 %573
      %575 = vrot.lane.b32.xlu0 %v520, 12
      %v576 = vpop.permute.xlu0 %575
      %577 = vrot.lane.b32.xlu0 %v521, 12
      %v578 = vpop.permute.xlu0 %577
      %579 = vrot.lane.b32.xlu0 %v522, 12
      %v580 = vpop.permute.xlu0 %579
      %581 = vrot.lane.b32.xlu0 %v523, 12
      %v582 = vpop.permute.xlu0 %581
      %583 = vrot.lane.b32.xlu0 %v524, 12
      %v584 = vpop.permute.xlu0 %583
      %585 = vrot.lane.b32.xlu0 %v525, 12
      %v586 = vpop.permute.xlu0 %585
      %587 = vrot.lane.b32.xlu0 %v526, 12
      %v588 = vpop.permute.xlu0 %587
      %589 = vrot.lane.b32.xlu0 %v527, 12
      %v590 = vpop.permute.xlu0 %589
      %591 = vrot.lane.b32.xlu0 %v528, 12
      %v592 = vpop.permute.xlu0 %591
      %593 = vrot.lane.b32.xlu0 %v529, 12
      %v594 = vpop.permute.xlu0 %593
      %595 = vrot.lane.b32.xlu0 %v530, 12
      %v596 = vpop.permute.xlu0 %595
      %597 = vrot.lane.b32.xlu0 %v531, 12
      %v598 = vpop.permute.xlu0 %597
      %599 = vrot.lane.b32.xlu0 %v532, 12
      %v600 = vpop.permute.xlu0 %599
      %601 = vrot.lane.b32.xlu0 %v533, 12
      %v602 = vpop.permute.xlu0 %601
      %603 = vrot.lane.b32.xlu0 %v534, 12
      %v604 = vpop.permute.xlu0 %603
      %605 = vrot.lane.b32.xlu0 %v535, 12
      %v606 = vpop.permute.xlu0 %605
      %607 = vrot.lane.b32.xlu0 %v536, 12
      %v608 = vpop.permute.xlu0 %607
      %609 = vrot.lane.b32.xlu0 %v537, 12
      %v610 = vpop.permute.xlu0 %609
      %611 = vrot.lane.b32.xlu0 %v538, 12
      %v612 = vpop.permute.xlu0 %611
      %613 = vrot.lane.b32.xlu0 %v539, 12
      %v614 = vpop.permute.xlu0 %613
      %615 = vrot.lane.b32.xlu0 %v540, 12
      %v616 = vpop.permute.xlu0 %615
      %617 = vrot.lane.b32.xlu0 %v541, 12
      %v618 = vpop.permute.xlu0 %617
      %619 = vrot.lane.b32.xlu0 %v542, 12
      %v620 = vpop.permute.xlu0 %619
      %621 = vrot.lane.b32.xlu0 %v543, 12
      %v622 = vpop.permute.xlu0 %621
      %623 = vrot.lane.b32.xlu0 %v544, 12
      %v624 = vpop.permute.xlu0 %623
      %625 = vrot.lane.b32.xlu0 %v545, 12
      %v626 = vpop.permute.xlu0 %625
      %627 = vrot.lane.b32.xlu0 %v546, 12
      %v628 = vpop.permute.xlu0 %627
      %629 = vrot.lane.b32.xlu0 %v555, 12
      %v630 = vpop.permute.xlu0 %629
      %631 = vrot.lane.b32.xlu0 %v556, 12
      %v632 = vpop.permute.xlu0 %631
      %v637 = vunpack.c.l.b16 %v353
      %v638 = vunpack.c.l.b16 %v354
      %v639 = vunpack.c.l.b16 %v355
      %v640 = vunpack.c.l.b16 %v356
      %v641 = vpack.c.b16 %v638, %v637
      %v642 = vpack.c.b16 %v640, %v639
      %643 = vrot.lane.b32.xlu0 %v513, 24
      %v644 = vpop.permute.xlu0 %643
      %645 = vrot.lane.b32.xlu0 %v514, 24
      %v646 = vpop.permute.xlu0 %645
      %647 = vrot.lane.b32.xlu0 %v515, 24
      %v648 = vpop.permute.xlu0 %647
      %649 = vrot.lane.b32.xlu0 %v516, 24
      %v650 = vpop.permute.xlu0 %649
      %651 = vrot.lane.b32.xlu0 %v517, 24
      %v652 = vpop.permute.xlu0 %651
      %653 = vrot.lane.b32.xlu0 %v518, 24
      %v654 = vpop.permute.xlu0 %653
      %655 = vrot.lane.b32.xlu0 %v519, 24
      %v656 = vpop.permute.xlu0 %655
      %657 = vrot.lane.b32.xlu0 %v520, 24
      %v658 = vpop.permute.xlu0 %657
      %659 = vrot.lane.b32.xlu0 %v521, 24
      %v660 = vpop.permute.xlu0 %659
      %661 = vrot.lane.b32.xlu0 %v522, 24
      %v662 = vpop.permute.xlu0 %661
      %663 = vrot.lane.b32.xlu0 %v523, 24
      %v664 = vpop.permute.xlu0 %663
      %665 = vrot.lane.b32.xlu0 %v524, 24
      %v666 = vpop.permute.xlu0 %665
      %667 = vrot.lane.b32.xlu0 %v525, 24
      %v668 = vpop.permute.xlu0 %667
      %669 = vrot.lane.b32.xlu0 %v526, 24
      %v670 = vpop.permute.xlu0 %669
      %671 = vrot.lane.b32.xlu0 %v527, 24
      %v672 = vpop.permute.xlu0 %671
      %673 = vrot.lane.b32.xlu0 %v528, 24
      %v674 = vpop.permute.xlu0 %673
      %675 = vrot.lane.b32.xlu0 %v529, 24
      %v676 = vpop.permute.xlu0 %675
      %677 = vrot.lane.b32.xlu0 %v530, 24
      %v678 = vpop.permute.xlu0 %677
      %679 = vrot.lane.b32.xlu0 %v531, 24
      %v680 = vpop.permute.xlu0 %679
      %681 = vrot.lane.b32.xlu0 %v532, 24
      %v682 = vpop.permute.xlu0 %681
      %683 = vrot.lane.b32.xlu0 %v533, 24
      %v684 = vpop.permute.xlu0 %683
      %685 = vrot.lane.b32.xlu0 %v534, 24
      %v686 = vpop.permute.xlu0 %685
      %687 = vrot.lane.b32.xlu0 %v535, 24
      %v688 = vpop.permute.xlu0 %687
      %689 = vrot.lane.b32.xlu0 %v536, 24
      %v690 = vpop.permute.xlu0 %689
      %691 = vrot.lane.b32.xlu0 %v537, 24
      %v692 = vpop.permute.xlu0 %691
      %693 = vrot.lane.b32.xlu0 %v538, 24
      %v694 = vpop.permute.xlu0 %693
      %695 = vrot.lane.b32.xlu0 %v539, 24
      %v696 = vpop.permute.xlu0 %695
      %697 = vrot.lane.b32.xlu0 %v540, 24
      %v698 = vpop.permute.xlu0 %697
      %699 = vrot.lane.b32.xlu0 %v541, 24
      %v700 = vpop.permute.xlu0 %699
      %701 = vrot.lane.b32.xlu0 %v542, 24
      %v702 = vpop.permute.xlu0 %701
      %703 = vrot.lane.b32.xlu0 %v543, 24
      %v704 = vpop.permute.xlu0 %703
      %705 = vrot.lane.b32.xlu0 %v544, 24
      %v706 = vpop.permute.xlu0 %705
      %707 = vrot.lane.b32.xlu0 %v545, 24
      %v708 = vpop.permute.xlu0 %707
      %709 = vrot.lane.b32.xlu0 %v546, 24
      %v710 = vpop.permute.xlu0 %709
      %711 = vrot.lane.b32.xlu0 %v555, 24
      %v712 = vpop.permute.xlu0 %711
      %713 = vrot.lane.b32.xlu0 %v556, 24
      %v714 = vpop.permute.xlu0 %713
      %715 = vrot.lane.b32.xlu0 %v641, 24
      %v716 = vpop.permute.xlu0 %715
      %717 = vrot.lane.b32.xlu0 %v642, 24
      %v718 = vpop.permute.xlu0 %717
      %vm719 = vcmask 97280
      %v722 = vsel %vm719, %v509, %v558
      %v725 = vsel %vm719, %v510, %v560
      %v728 = vsel %vm719, %v511, %v562
      %v731 = vsel %vm719, %v512, %v564
      %v734 = vsel %vm719, %v513, %v566
      %v737 = vsel %vm719, %v514, %v568
      %v740 = vsel %vm719, %v515, %v570
      %v743 = vsel %vm719, %v516, %v572
      %v746 = vsel %vm719, %v517, %v574
      %v749 = vsel %vm719, %v518, %v576
      %v752 = vsel %vm719, %v519, %v578
      %v755 = vsel %vm719, %v520, %v580
      %v758 = vsel %vm719, %v521, %v582
      %v761 = vsel %vm719, %v522, %v584
      %v764 = vsel %vm719, %v523, %v586
      %v767 = vsel %vm719, %v524, %v588
      %v770 = vsel %vm719, %v525, %v590
      %v773 = vsel %vm719, %v526, %v592
      %v776 = vsel %vm719, %v527, %v594
      %v779 = vsel %vm719, %v528, %v596
      %v782 = vsel %vm719, %v529, %v598
      %v785 = vsel %vm719, %v530, %v600
      %v788 = vsel %vm719, %v531, %v602
      %v791 = vsel %vm719, %v532, %v604
      %v794 = vsel %vm719, %v533, %v606
      %v797 = vsel %vm719, %v534, %v608
      %v800 = vsel %vm719, %v535, %v610
      %v803 = vsel %vm719, %v536, %v612
      %v806 = vsel %vm719, %v537, %v614
      %v809 = vsel %vm719, %v538, %v616
      %v812 = vsel %vm719, %v539, %v618
      %v815 = vsel %vm719, %v540, %v620
      %v818 = vsel %vm719, %v541, %v622
      %v821 = vsel %vm719, %v542, %v624
      %v824 = vsel %vm719, %v543, %v626
      %v827 = vsel %vm719, %v544, %v628
      %v830 = vsel %vm719, %v545, %v630
      %v833 = vsel %vm719, %v546, %v632
      %vm834 = vcmask 195584
      %v836 = vsel %vm834, %v722, %v644
      %v838 = vsel %vm834, %v725, %v646
      %v840 = vsel %vm834, %v728, %v648
      %v842 = vsel %vm834, %v731, %v650
      %v844 = vsel %vm834, %v734, %v652
      %v846 = vsel %vm834, %v737, %v654
      %v848 = vsel %vm834, %v740, %v656
      %v850 = vsel %vm834, %v743, %v658
      %v852 = vsel %vm834, %v746, %v660
      %v854 = vsel %vm834, %v749, %v662
      %v856 = vsel %vm834, %v752, %v664
      %v858 = vsel %vm834, %v755, %v666
      %v860 = vsel %vm834, %v758, %v668
      %v862 = vsel %vm834, %v761, %v670
      %v864 = vsel %vm834, %v764, %v672
      %v866 = vsel %vm834, %v767, %v674
      %v868 = vsel %vm834, %v770, %v676
      %v870 = vsel %vm834, %v773, %v678
      %v872 = vsel %vm834, %v776, %v680
      %v874 = vsel %vm834, %v779, %v682
      %v876 = vsel %vm834, %v782, %v684
      %v878 = vsel %vm834, %v785, %v686
      %v880 = vsel %vm834, %v788, %v688
      %v882 = vsel %vm834, %v791, %v690
      %v884 = vsel %vm834, %v794, %v692
      %v886 = vsel %vm834, %v797, %v694
      %v888 = vsel %vm834, %v800, %v696
      %v890 = vsel %vm834, %v803, %v698
      %v892 = vsel %vm834, %v806, %v700
      %v894 = vsel %vm834, %v809, %v702
      %v896 = vsel %vm834, %v812, %v704
      %v898 = vsel %vm834, %v815, %v706
      %v900 = vsel %vm834, %v818, %v708
      %v902 = vsel %vm834, %v821, %v710
      %v904 = vsel %vm834, %v824, %v712
      %v906 = vsel %vm834, %v827, %v714
      %v908 = vsel %vm834, %v830, %v716
      %v910 = vsel %vm834, %v833, %v718
      %v911 = vld [vmem:[%s2] sm:$0xf]
      %v912 = vld [vmem:[%s2 + $0x4] sm:$0xf]
      %v913 = vld [vmem:[%s2 + $0x8] sm:$0xf]
      %v914 = vld [vmem:[%s2 + $0xc] sm:$0xf]
      %v915 = vld [vmem:[%s2 + $0x10] sm:$0x3]
      %v916 = vld [vmem:[%s3] sm:$0x1]
      %v918 = vperm.slane %v916, 0
      %v925 = vunpack.c.l.b16 %v911
      %v926 = vunpack.c.l.b16 %v912
      %v927 = vunpack.c.l.b16 %v913
      %v928 = vunpack.c.l.b16 %v914
      %v929 = vunpack.c.l.b16 %v915
      %v930 = vpack.c.b16 %v926, %v925
      %v931 = vpack.c.b16 %v928, %v927
      %v932 = vpack.c.b16 %v929, %v929
      %vm935 = vcmask 293888
      %v936 = vsel %vm935, %v836, 0
      %v938 = vsel %vm935, %v838, 0
      %v940 = vsel %vm935, %v840, 0
      %v942 = vsel %vm935, %v842, 0
      %v944 = vsel %vm935, %v844, 0
      %v946 = vsel %vm935, %v846, 0
      %v948 = vsel %vm935, %v848, 0
      %v950 = vsel %vm935, %v850, 0
      %v952 = vsel %vm935, %v852, 0
      %v954 = vsel %vm935, %v854, 0
      %v956 = vsel %vm935, %v856, 0
      %v958 = vsel %vm935, %v858, 0
      %v960 = vsel %vm935, %v860, 0
      %v962 = vsel %vm935, %v862, 0
      %v964 = vsel %vm935, %v864, 0
      %v966 = vsel %vm935, %v866, 0
      %v968 = vsel %vm935, %v868, 0
      %v970 = vsel %vm935, %v870, 0
      %v972 = vsel %vm935, %v872, 0
      %v974 = vsel %vm935, %v874, 0
      %v976 = vsel %vm935, %v876, 0
      %v978 = vsel %vm935, %v878, 0
      %v980 = vsel %vm935, %v880, 0
      %v982 = vsel %vm935, %v882, 0
      %v984 = vsel %vm935, %v884, 0
      %v986 = vsel %vm935, %v886, 0
      %v988 = vsel %vm935, %v888, 0
      %v990 = vsel %vm935, %v890, 0
      %v992 = vsel %vm935, %v892, 0
      %v994 = vsel %vm935, %v894, 0
      %v996 = vsel %vm935, %v896, 0
      %v998 = vsel %vm935, %v898, 0
      %v1000 = vsel %vm935, %v900, 0
      %v1002 = vsel %vm935, %v902, 0
      %v1004 = vsel %vm935, %v904, 0
      %v1006 = vsel %vm935, %v906, 0
      %v1008 = vsel %vm935, %v908, 0
      %v1010 = vsel %vm935, %v910, 0
      %vm1012 = vcmask 1041408
      %v1014 = vsel %vm1012, %v932, 0
      %1016 = vmatpush.bf16.msra.mxu0 0
      %1017 = vmatpush.bf16.msra.mxu0 0
      %1018 = vmatpush.bf16.msra.mxu0 0
      %1019 = vmatpush.bf16.msra.mxu0 0
      %1020 = vmatpush.bf16.msra.mxu0 0
      %1021 = vmatpush.bf16.msra.mxu0 %v1014
      %1022 = vmatpush.bf16.msra.mxu0 %v931
      %1023 = vmatpush.bf16.msra.mxu0 %v930
      %1024 = vmatmul.bf16.gmra.mxu0 %v936
      %v1025 = vpop.f32.mrf.mxu0
      %v1026 = vadd.f32 %v918, %v1025
      %v1027 = vpop.f32.mrf.mxu0
      %v1028 = vadd.f32 %v918, %v1027
      %1029 = vmatmul.bf16.gmra.mxu0 %v938
      %v1030 = vpop.f32.mrf.mxu0
      %v1031 = vadd.f32 %v918, %v1030
      %v1032 = vpop.f32.mrf.mxu0
      %v1033 = vadd.f32 %v918, %v1032
      %1034 = vmatmul.bf16.gmra.mxu0 %v940
      %v1035 = vpop.f32.mrf.mxu0
      %v1036 = vadd.f32 %v918, %v1035
      %v1037 = vpop.f32.mrf.mxu0
      %v1038 = vadd.f32 %v918, %v1037
      %1039 = vmatmul.bf16.gmra.mxu0 %v942
      %v1040 = vpop.f32.mrf.mxu0
      %v1041 = vadd.f32 %v918, %v1040
      %v1042 = vpop.f32.mrf.mxu0
      %v1043 = vadd.f32 %v918, %v1042
      %1044 = vmatmul.bf16.gmra.mxu0 %v944
      %v1045 = vpop.f32.mrf.mxu0
      %v1046 = vadd.f32 %v918, %v1045
      %v1047 = vpop.f32.mrf.mxu0
      %v1048 = vadd.f32 %v918, %v1047
      %1049 = vmatmul.bf16.gmra.mxu0 %v946
      %v1050 = vpop.f32.mrf.mxu0
      %v1051 = vadd.f32 %v918, %v1050
      %v1052 = vpop.f32.mrf.mxu0
      %v1053 = vadd.f32 %v918, %v1052
      %1054 = vmatmul.bf16.gmra.mxu0 %v948
      %v1055 = vpop.f32.mrf.mxu0
      %v1056 = vadd.f32 %v918, %v1055
      %v1057 = vpop.f32.mrf.mxu0
      %v1058 = vadd.f32 %v918, %v1057
      %1059 = vmatmul.bf16.gmra.mxu0 %v950
      %v1060 = vpop.f32.mrf.mxu0
      %v1061 = vadd.f32 %v918, %v1060
      %v1062 = vpop.f32.mrf.mxu0
      %v1063 = vadd.f32 %v918, %v1062
      %1064 = vmatmul.bf16.gmra.mxu0 %v952
      %v1065 = vpop.f32.mrf.mxu0
      %v1066 = vadd.f32 %v918, %v1065
      %v1067 = vpop.f32.mrf.mxu0
      %v1068 = vadd.f32 %v918, %v1067
      %1069 = vmatmul.bf16.gmra.mxu0 %v954
      %v1070 = vpop.f32.mrf.mxu0
      %v1071 = vadd.f32 %v918, %v1070
      %v1072 = vpop.f32.mrf.mxu0
      %v1073 = vadd.f32 %v918, %v1072
      %1074 = vmatmul.bf16.gmra.mxu0 %v956
      %v1075 = vpop.f32.mrf.mxu0
      %v1076 = vadd.f32 %v918, %v1075
      %v1077 = vpop.f32.mrf.mxu0
      %v1078 = vadd.f32 %v918, %v1077
      %1079 = vmatmul.bf16.gmra.mxu0 %v958
      %v1080 = vpop.f32.mrf.mxu0
      %v1081 = vadd.f32 %v918, %v1080
      %v1082 = vpop.f32.mrf.mxu0
      %v1083 = vadd.f32 %v918, %v1082
      %1084 = vmatmul.bf16.gmra.mxu0 %v960
      %v1085 = vpop.f32.mrf.mxu0
      %v1086 = vadd.f32 %v918, %v1085
      %v1087 = vpop.f32.mrf.mxu0
      %v1088 = vadd.f32 %v918, %v1087
      %1089 = vmatmul.bf16.gmra.mxu0 %v962
      %v1090 = vpop.f32.mrf.mxu0
      %v1091 = vadd.f32 %v918, %v1090
      %v1092 = vpop.f32.mrf.mxu0
      %v1093 = vadd.f32 %v918, %v1092
      %1094 = vmatmul.bf16.gmra.mxu0 %v964
      %v1095 = vpop.f32.mrf.mxu0
      %v1096 = vadd.f32 %v918, %v1095
      %v1097 = vpop.f32.mrf.mxu0
      %v1098 = vadd.f32 %v918, %v1097
      %1099 = vmatmul.bf16.gmra.mxu0 %v966
      %v1100 = vpop.f32.mrf.mxu0
      %v1101 = vadd.f32 %v918, %v1100
      %v1102 = vpop.f32.mrf.mxu0
      %v1103 = vadd.f32 %v918, %v1102
      %1104 = vmatmul.bf16.gmra.mxu0 %v968
      %v1105 = vpop.f32.mrf.mxu0
      %v1106 = vadd.f32 %v918, %v1105
      %v1107 = vpop.f32.mrf.mxu0
      %v1108 = vadd.f32 %v918, %v1107
      %1109 = vmatmul.bf16.gmra.mxu0 %v970
      %v1110 = vpop.f32.mrf.mxu0
      %v1111 = vadd.f32 %v918, %v1110
      %v1112 = vpop.f32.mrf.mxu0
      %v1113 = vadd.f32 %v918, %v1112
      %1114 = vmatmul.bf16.gmra.mxu0 %v972
      %v1115 = vpop.f32.mrf.mxu0
      %v1116 = vadd.f32 %v918, %v1115
      %v1117 = vpop.f32.mrf.mxu0
      %v1118 = vadd.f32 %v918, %v1117
      %1119 = vmatmul.bf16.gmra.mxu0 %v974
      %v1120 = vpop.f32.mrf.mxu0
      %v1121 = vadd.f32 %v918, %v1120
      %v1122 = vpop.f32.mrf.mxu0
      %v1123 = vadd.f32 %v918, %v1122
      %1124 = vmatmul.bf16.gmra.mxu0 %v976
      %v1125 = vpop.f32.mrf.mxu0
      %v1126 = vadd.f32 %v918, %v1125
      %v1127 = vpop.f32.mrf.mxu0
      %v1128 = vadd.f32 %v918, %v1127
      %1129 = vmatmul.bf16.gmra.mxu0 %v978
      %v1130 = vpop.f32.mrf.mxu0
      %v1131 = vadd.f32 %v918, %v1130
      %v1132 = vpop.f32.mrf.mxu0
      %v1133 = vadd.f32 %v918, %v1132
      %1134 = vmatmul.bf16.gmra.mxu0 %v980
      %v1135 = vpop.f32.mrf.mxu0
      %v1136 = vadd.f32 %v918, %v1135
      %v1137 = vpop.f32.mrf.mxu0
      %v1138 = vadd.f32 %v918, %v1137
      %1139 = vmatmul.bf16.gmra.mxu0 %v982
      %v1140 = vpop.f32.mrf.mxu0
      %v1141 = vadd.f32 %v918, %v1140
      %v1142 = vpop.f32.mrf.mxu0
      %v1143 = vadd.f32 %v918, %v1142
      %1144 = vmatmul.bf16.gmra.mxu0 %v984
      %v1145 = vpop.f32.mrf.mxu0
      %v1146 = vadd.f32 %v918, %v1145
      %v1147 = vpop.f32.mrf.mxu0
      %v1148 = vadd.f32 %v918, %v1147
      %1149 = vmatmul.bf16.gmra.mxu0 %v986
      %v1150 = vpop.f32.mrf.mxu0
      %v1151 = vadd.f32 %v918, %v1150
      %v1152 = vpop.f32.mrf.mxu0
      %v1153 = vadd.f32 %v918, %v1152
      %1154 = vmatmul.bf16.gmra.mxu0 %v988
      %v1155 = vpop.f32.mrf.mxu0
      %v1156 = vadd.f32 %v918, %v1155
      %v1157 = vpop.f32.mrf.mxu0
      %v1158 = vadd.f32 %v918, %v1157
      %1159 = vmatmul.bf16.gmra.mxu0 %v990
      %v1160 = vpop.f32.mrf.mxu0
      %v1161 = vadd.f32 %v918, %v1160
      %v1162 = vpop.f32.mrf.mxu0
      %v1163 = vadd.f32 %v918, %v1162
      %1164 = vmatmul.bf16.gmra.mxu0 %v992
      %v1165 = vpop.f32.mrf.mxu0
      %v1166 = vadd.f32 %v918, %v1165
      %v1167 = vpop.f32.mrf.mxu0
      %v1168 = vadd.f32 %v918, %v1167
      %1169 = vmatmul.bf16.gmra.mxu0 %v994
      %v1170 = vpop.f32.mrf.mxu0
      %v1171 = vadd.f32 %v918, %v1170
      %v1172 = vpop.f32.mrf.mxu0
      %v1173 = vadd.f32 %v918, %v1172
      %1174 = vmatmul.bf16.gmra.mxu0 %v996
      %v1175 = vpop.f32.mrf.mxu0
      %v1176 = vadd.f32 %v918, %v1175
      %v1177 = vpop.f32.mrf.mxu0
      %v1178 = vadd.f32 %v918, %v1177
      %1179 = vmatmul.bf16.gmra.mxu0 %v998
      %v1180 = vpop.f32.mrf.mxu0
      %v1181 = vadd.f32 %v918, %v1180
      %v1182 = vpop.f32.mrf.mxu0
      %v1183 = vadd.f32 %v918, %v1182
      %1184 = vmatmul.bf16.gmra.mxu0 %v1000
      %v1185 = vpop.f32.mrf.mxu0
      %v1186 = vadd.f32 %v918, %v1185
      %v1187 = vpop.f32.mrf.mxu0
      %v1188 = vadd.f32 %v918, %v1187
      %1189 = vmatmul.bf16.gmra.mxu0 %v1002
      %v1190 = vpop.f32.mrf.mxu0
      %v1191 = vadd.f32 %v918, %v1190
      %v1192 = vpop.f32.mrf.mxu0
      %v1193 = vadd.f32 %v918, %v1192
      %1194 = vmatmul.bf16.gmra.mxu0 %v1004
      %v1195 = vpop.f32.mrf.mxu0
      %v1196 = vadd.f32 %v918, %v1195
      %v1197 = vpop.f32.mrf.mxu0
      %v1198 = vadd.f32 %v918, %v1197
      %1199 = vmatmul.bf16.gmra.mxu0 %v1006
      %v1200 = vpop.f32.mrf.mxu0
      %v1201 = vadd.f32 %v918, %v1200
      %v1202 = vpop.f32.mrf.mxu0
      %v1203 = vadd.f32 %v918, %v1202
      %1204 = vmatmul.bf16.gmra.mxu0 %v1008
      %v1205 = vpop.f32.mrf.mxu0
      %v1206 = vadd.f32 %v918, %v1205
      %v1207 = vpop.f32.mrf.mxu0
      %1208 = vmatmul.bf16.gmra.mxu0 %v1010
      %v1209 = vpop.f32.mrf.mxu0
      %v1210 = vpop.f32.mrf.mxu0
      %1211 = vdwg.mxu0
      %v1212 = vmax.f32 %v1026, 0.0
      %v1213 = vmax.f32 %v1028, 0.0
      %v1214 = vmax.f32 %v1031, 0.0
      %v1215 = vmax.f32 %v1033, 0.0
      %v1216 = vmax.f32 %v1036, 0.0
      %v1217 = vmax.f32 %v1038, 0.0
      %v1218 = vmax.f32 %v1041, 0.0
      %v1219 = vmax.f32 %v1043, 0.0
      %v1220 = vmax.f32 %v1046, 0.0
      %v1221 = vmax.f32 %v1048, 0.0
      %v1222 = vmax.f32 %v1051, 0.0
      %v1223 = vmax.f32 %v1053, 0.0
      %v1224 = vmax.f32 %v1056, 0.0
      %v1225 = vmax.f32 %v1058, 0.0
      %v1226 = vmax.f32 %v1061, 0.0
      %v1227 = vmax.f32 %v1063, 0.0
      %v1228 = vmax.f32 %v1066, 0.0
      %v1229 = vmax.f32 %v1068, 0.0
      %v1230 = vmax.f32 %v1071, 0.0
      %v1231 = vmax.f32 %v1073, 0.0
      %v1232 = vmax.f32 %v1076, 0.0
      %v1233 = vmax.f32 %v1078, 0.0
      %v1234 = vmax.f32 %v1081, 0.0
      %v1235 = vmax.f32 %v1083, 0.0
      %v1236 = vmax.f32 %v1086, 0.0
      %v1237 = vmax.f32 %v1088, 0.0
      %v1238 = vmax.f32 %v1091, 0.0
      %v1239 = vmax.f32 %v1093, 0.0
      %v1240 = vmax.f32 %v1096, 0.0
      %v1241 = vmax.f32 %v1098, 0.0
      %v1242 = vmax.f32 %v1101, 0.0
      %v1243 = vmax.f32 %v1103, 0.0
      %v1244 = vmax.f32 %v1106, 0.0
      %v1245 = vmax.f32 %v1108, 0.0
      %v1246 = vmax.f32 %v1111, 0.0
      %v1247 = vmax.f32 %v1113, 0.0
      %v1248 = vmax.f32 %v1116, 0.0
      %v1249 = vmax.f32 %v1118, 0.0
      %v1250 = vmax.f32 %v1121, 0.0
      %v1251 = vmax.f32 %v1123, 0.0
      %v1252 = vmax.f32 %v1126, 0.0
      %v1253 = vmax.f32 %v1128, 0.0
      %v1254 = vmax.f32 %v1131, 0.0
      %v1255 = vmax.f32 %v1133, 0.0
      %v1256 = vmax.f32 %v1136, 0.0
      %v1257 = vmax.f32 %v1138, 0.0
      %v1258 = vmax.f32 %v1141, 0.0
      %v1259 = vmax.f32 %v1143, 0.0
      %v1260 = vmax.f32 %v1146, 0.0
      %v1261 = vmax.f32 %v1148, 0.0
      %v1262 = vmax.f32 %v1151, 0.0
      %v1263 = vmax.f32 %v1153, 0.0
      %v1264 = vmax.f32 %v1156, 0.0
      %v1265 = vmax.f32 %v1158, 0.0
      %v1266 = vmax.f32 %v1161, 0.0
      %v1267 = vmax.f32 %v1163, 0.0
      %v1268 = vmax.f32 %v1166, 0.0
      %v1269 = vmax.f32 %v1168, 0.0
      %v1270 = vmax.f32 %v1171, 0.0
      %v1271 = vmax.f32 %v1173, 0.0
      %v1272 = vmax.f32 %v1176, 0.0
      %v1273 = vmax.f32 %v1178, 0.0
      %v1274 = vmax.f32 %v1181, 0.0
      %v1275 = vmax.f32 %v1183, 0.0
      %v1276 = vmax.f32 %v1186, 0.0
      %v1277 = vmax.f32 %v1188, 0.0
      %v1278 = vmax.f32 %v1191, 0.0
      %v1279 = vmax.f32 %v1193, 0.0
      %v1280 = vmax.f32 %v1196, 0.0
      %v1281 = vmax.f32 %v1198, 0.0
      %v1282 = vmax.f32 %v1201, 0.0
      %v1283 = vmax.f32 %v1203, 0.0
      %v1284 = vmax.f32 %v1206, 0.0
      %v1285 = vlaneseq
      %v1286 = vshrl.u32 %v1285, 7
      %v1287 = vadd.s32 %v1286, 8
      %v1288 = vadd.s32 %v1286, 16
      %v1289 = vadd.s32 %v1286, 24
      %v1290 = vadd.s32 %v1286, 32
      %v1291 = vadd.s32 %v1286, 40
      %v1292 = vadd.s32 %v1286, 48
      %v1293 = vadd.s32 %v1286, 56
      %v1294 = vadd.s32 %v1286, 64
      %v1295 = vadd.s32 %v1286, 72
      %v1296 = vadd.s32 %v1286, 80
      %v1297 = vadd.s32 %v1286, 88
      %v1298 = vadd.s32 %v1286, 96
      %v1299 = vadd.s32 %v1286, 104
      %v1300 = vadd.s32 %v1286, 112
      %v1301 = vadd.s32 %v1286, 120
      %v1302 = vadd.s32 %v1286, 128
      %v1303 = vadd.s32 %v1286, 136
      %v1304 = vadd.s32 %v1286, 144
      %v1305 = vadd.s32 %v1286, 152
      %v1306 = vadd.s32 %v1286, 160
      %v1307 = vadd.s32 %v1286, 168
      %v1308 = vadd.s32 %v1286, 176
      %v1309 = vadd.s32 %v1286, 184
      %v1310 = vadd.s32 %v1286, 192
      %v1311 = vadd.s32 %v1286, 200
      %v1312 = vadd.s32 %v1286, 208
      %v1313 = vadd.s32 %v1286, 216
      %v1314 = vadd.s32 %v1286, 224
      %v1315 = vadd.s32 %v1286, 232
      %v1316 = vadd.s32 %v1286, 240
      %v1317 = vadd.s32 %v1286, 248
      %v1318 = vadd.s32 %v1286, 256
      %v1319 = vadd.s32 %v1286, 264
      %v1320 = vadd.s32 %v1286, 272
      %v1321 = vadd.s32 %v1286, 280
      %v1322 = vadd.s32 %v1286, 288
      %v1323 = vadd.s32 %v1286, 296
      %v1324 = vadd.s32 %v1286, 304
      %v1325 = vadd.s32 %v1286, 312
      %v1326 = vadd.s32 %v1286, 320
      %v1327 = vadd.s32 %v1286, 328
      %v1328 = vadd.s32 %v1286, 336
      %v1329 = vadd.s32 %v1286, 344
      %v1330 = vadd.s32 %v1286, 352
      %v1331 = vadd.s32 %v1286, 360
      %v1332 = vadd.s32 %v1286, 368
      %v1333 = vadd.s32 %v1286, 376
      %v1334 = vadd.s32 %v1286, 384
      %v1335 = vadd.s32 %v1286, 392
      %v1336 = vadd.s32 %v1286, 400
      %v1337 = vadd.s32 %v1286, 408
      %v1338 = vadd.s32 %v1286, 416
      %v1339 = vadd.s32 %v1286, 424
      %v1340 = vadd.s32 %v1286, 432
      %v1341 = vadd.s32 %v1286, 440
      %v1342 = vadd.s32 %v1286, 448
      %v1343 = vadd.s32 %v1286, 456
      %v1344 = vadd.s32 %v1286, 464
      %v1345 = vadd.s32 %v1286, 472
      %v1346 = vadd.s32 %v1286, 480
      %v1347 = vadd.s32 %v1286, 488
      %v1348 = vadd.s32 %v1286, 496
      %v1349 = vadd.s32 %v1286, 504
      %v1350 = vadd.s32 %v1286, 512
      %v1351 = vadd.s32 %v1286, 520
      %v1352 = vadd.s32 %v1286, 528
      %v1353 = vadd.s32 %v1286, 536
      %v1354 = vadd.s32 %v1286, 544
      %v1355 = vadd.s32 %v1286, 552
      %v1356 = vadd.s32 %v1286, 560
      %v1357 = vadd.s32 %v1286, 568
      %v1358 = vadd.s32 %v1286, 576
      %v1359 = vand.u32 %v1286, 31
      %v1360 = vand.u32 %v1287, 31
      %v1361 = vand.u32 %v1288, 31
      %v1362 = vand.u32 %v1289, 31
      %v1363 = vand.u32 %v1290, 31
      %v1364 = vand.u32 %v1291, 31
      %v1365 = vand.u32 %v1292, 31
      %v1366 = vand.u32 %v1293, 31
      %v1367 = vand.u32 %v1294, 31
      %v1368 = vand.u32 %v1295, 31
      %v1369 = vand.u32 %v1296, 31
      %v1370 = vand.u32 %v1297, 31
      %v1371 = vand.u32 %v1298, 31
      %v1372 = vand.u32 %v1299, 31
      %v1373 = vand.u32 %v1300, 31
      %v1374 = vand.u32 %v1301, 31
      %v1375 = vand.u32 %v1302, 31
      %v1376 = vand.u32 %v1303, 31
      %v1377 = vand.u32 %v1304, 31
      %v1378 = vand.u32 %v1305, 31
      %v1379 = vand.u32 %v1306, 31
      %v1380 = vand.u32 %v1307, 31
      %v1381 = vand.u32 %v1308, 31
      %v1382 = vand.u32 %v1309, 31
      %v1383 = vand.u32 %v1310, 31
      %v1384 = vand.u32 %v1311, 31
      %v1385 = vand.u32 %v1312, 31
      %v1386 = vand.u32 %v1313, 31
      %v1387 = vand.u32 %v1314, 31
      %v1388 = vand.u32 %v1315, 31
      %v1389 = vand.u32 %v1316, 31
      %v1390 = vand.u32 %v1317, 31
      %v1391 = vand.u32 %v1318, 31
      %v1392 = vand.u32 %v1319, 31
      %v1393 = vand.u32 %v1320, 31
      %v1394 = vand.u32 %v1321, 31
      %v1395 = vand.u32 %v1322, 31
      %v1396 = vand.u32 %v1323, 31
      %v1397 = vand.u32 %v1324, 31
      %v1398 = vand.u32 %v1325, 31
      %v1399 = vand.u32 %v1326, 31
      %v1400 = vand.u32 %v1327, 31
      %v1401 = vand.u32 %v1328, 31
      %v1402 = vand.u32 %v1329, 31
      %v1403 = vand.u32 %v1330, 31
      %v1404 = vand.u32 %v1331, 31
      %v1405 = vand.u32 %v1332, 31
      %v1406 = vand.u32 %v1333, 31
      %v1407 = vand.u32 %v1334, 31
      %v1408 = vand.u32 %v1335, 31
      %v1409 = vand.u32 %v1336, 31
      %v1410 = vand.u32 %v1337, 31
      %v1411 = vand.u32 %v1338, 31
      %v1412 = vand.u32 %v1339, 31
      %v1413 = vand.u32 %v1340, 31
      %v1414 = vand.u32 %v1341, 31
      %v1415 = vand.u32 %v1342, 31
      %v1416 = vand.u32 %v1343, 31
      %v1417 = vand.u32 %v1344, 31
      %v1418 = vand.u32 %v1345, 31
      %v1419 = vand.u32 %v1346, 31
      %v1420 = vand.u32 %v1347, 31
      %v1421 = vand.u32 %v1348, 31
      %v1422 = vand.u32 %v1349, 31
      %v1423 = vand.u32 %v1350, 31
      %v1424 = vand.u32 %v1351, 31
      %v1425 = vand.u32 %v1352, 31
      %v1426 = vand.u32 %v1353, 31
      %v1427 = vand.u32 %v1354, 31
      %v1428 = vand.u32 %v1355, 31
      %v1429 = vand.u32 %v1356, 31
      %v1430 = vand.u32 %v1357, 31
      %v1431 = vand.u32 %v1358, 31
      %vm1432 = vcmp.ge.s32.totalorder %v1286, 32
      %vm1433 = vcmp.ge.s32.totalorder %v1287, 32
      %vm1434 = vcmp.ge.s32.totalorder %v1288, 32
      %vm1435 = vcmp.ge.s32.totalorder %v1289, 32
      %vm1436 = vcmp.ge.s32.totalorder %v1290, 32
      %vm1437 = vcmp.ge.s32.totalorder %v1291, 32
      %vm1438 = vcmp.ge.s32.totalorder %v1292, 32
      %vm1439 = vcmp.ge.s32.totalorder %v1293, 32
      %vm1440 = vcmp.ge.s32.totalorder %v1294, 32
      %vm1441 = vcmp.ge.s32.totalorder %v1295, 32
      %vm1442 = vcmp.ge.s32.totalorder %v1296, 32
      %vm1443 = vcmp.ge.s32.totalorder %v1297, 32
      %vm1444 = vcmp.ge.s32.totalorder %v1298, 32
      %vm1445 = vcmp.ge.s32.totalorder %v1299, 32
      %vm1446 = vcmp.ge.s32.totalorder %v1300, 32
      %vm1447 = vcmp.ge.s32.totalorder %v1301, 32
      %vm1448 = vcmp.ge.s32.totalorder %v1302, 32
      %vm1449 = vcmp.ge.s32.totalorder %v1303, 32
      %vm1450 = vcmp.ge.s32.totalorder %v1304, 32
      %vm1451 = vcmp.ge.s32.totalorder %v1305, 32
      %vm1452 = vcmp.ge.s32.totalorder %v1306, 32
      %vm1453 = vcmp.ge.s32.totalorder %v1307, 32
      %vm1454 = vcmp.ge.s32.totalorder %v1308, 32
      %vm1455 = vcmp.ge.s32.totalorder %v1309, 32
      %vm1456 = vcmp.ge.s32.totalorder %v1310, 32
      %vm1457 = vcmp.ge.s32.totalorder %v1311, 32
      %vm1458 = vcmp.ge.s32.totalorder %v1312, 32
      %vm1459 = vcmp.ge.s32.totalorder %v1313, 32
      %vm1460 = vcmp.ge.s32.totalorder %v1314, 32
      %vm1461 = vcmp.ge.s32.totalorder %v1315, 32
      %vm1462 = vcmp.ge.s32.totalorder %v1316, 32
      %vm1463 = vcmp.ge.s32.totalorder %v1317, 32
      %vm1464 = vcmp.ge.s32.totalorder %v1318, 32
      %vm1465 = vcmp.ge.s32.totalorder %v1319, 32
      %vm1466 = vcmp.ge.s32.totalorder %v1320, 32
      %vm1467 = vcmp.ge.s32.totalorder %v1321, 32
      %vm1468 = vcmp.ge.s32.totalorder %v1322, 32
      %vm1469 = vcmp.ge.s32.totalorder %v1323, 32
      %vm1470 = vcmp.ge.s32.totalorder %v1324, 32
      %vm1471 = vcmp.ge.s32.totalorder %v1325, 32
      %vm1472 = vcmp.ge.s32.totalorder %v1326, 32
      %vm1473 = vcmp.ge.s32.totalorder %v1327, 32
      %vm1474 = vcmp.ge.s32.totalorder %v1328, 32
      %vm1475 = vcmp.ge.s32.totalorder %v1329, 32
      %vm1476 = vcmp.ge.s32.totalorder %v1330, 32
      %vm1477 = vcmp.ge.s32.totalorder %v1331, 32
      %vm1478 = vcmp.ge.s32.totalorder %v1332, 32
      %vm1479 = vcmp.ge.s32.totalorder %v1333, 32
      %vm1480 = vcmp.ge.s32.totalorder %v1334, 32
      %vm1481 = vcmp.ge.s32.totalorder %v1335, 32
      %vm1482 = vcmp.ge.s32.totalorder %v1336, 32
      %vm1483 = vcmp.ge.s32.totalorder %v1337, 32
      %vm1484 = vcmp.ge.s32.totalorder %v1338, 32
      %vm1485 = vcmp.ge.s32.totalorder %v1339, 32
      %vm1486 = vcmp.ge.s32.totalorder %v1340, 32
      %vm1487 = vcmp.ge.s32.totalorder %v1341, 32
      %vm1488 = vcmp.ge.s32.totalorder %v1342, 32
      %vm1489 = vcmp.ge.s32.totalorder %v1343, 32
      %vm1490 = vcmp.ge.s32.totalorder %v1344, 32
      %vm1491 = vcmp.ge.s32.totalorder %v1345, 32
      %vm1492 = vcmp.ge.s32.totalorder %v1346, 32
      %vm1493 = vcmp.ge.s32.totalorder %v1347, 32
      %vm1494 = vcmp.ge.s32.totalorder %v1348, 32
      %vm1495 = vcmp.ge.s32.totalorder %v1349, 32
      %vm1496 = vcmp.ge.s32.totalorder %v1350, 32
      %vm1497 = vcmp.ge.s32.totalorder %v1351, 32
      %vm1498 = vcmp.ge.s32.totalorder %v1352, 32
      %vm1499 = vcmp.ge.s32.totalorder %v1353, 32
      %vm1500 = vcmp.ge.s32.totalorder %v1354, 32
      %vm1501 = vcmp.ge.s32.totalorder %v1355, 32
      %vm1502 = vcmp.ge.s32.totalorder %v1356, 32
      %vm1503 = vcmp.ge.s32.totalorder %v1357, 32
      %vm1504 = vcmp.ge.s32.totalorder %v1358, 32
      %vm1505 = vcmp.lt.s32.totalorder %v1286, 544
      %vm1506 = vcmp.lt.s32.totalorder %v1287, 544
      %vm1507 = vcmp.lt.s32.totalorder %v1288, 544
      %vm1508 = vcmp.lt.s32.totalorder %v1289, 544
      %vm1509 = vcmp.lt.s32.totalorder %v1290, 544
      %vm1510 = vcmp.lt.s32.totalorder %v1291, 544
      %vm1511 = vcmp.lt.s32.totalorder %v1292, 544
      %vm1512 = vcmp.lt.s32.totalorder %v1293, 544
      %vm1513 = vcmp.lt.s32.totalorder %v1294, 544
      %vm1514 = vcmp.lt.s32.totalorder %v1295, 544
      %vm1515 = vcmp.lt.s32.totalorder %v1296, 544
      %vm1516 = vcmp.lt.s32.totalorder %v1297, 544
      %vm1517 = vcmp.lt.s32.totalorder %v1298, 544
      %vm1518 = vcmp.lt.s32.totalorder %v1299, 544
      %vm1519 = vcmp.lt.s32.totalorder %v1300, 544
      %vm1520 = vcmp.lt.s32.totalorder %v1301, 544
      %vm1521 = vcmp.lt.s32.totalorder %v1302, 544
      %vm1522 = vcmp.lt.s32.totalorder %v1303, 544
      %vm1523 = vcmp.lt.s32.totalorder %v1304, 544
      %vm1524 = vcmp.lt.s32.totalorder %v1305, 544
      %vm1525 = vcmp.lt.s32.totalorder %v1306, 544
      %vm1526 = vcmp.lt.s32.totalorder %v1307, 544
      %vm1527 = vcmp.lt.s32.totalorder %v1308, 544
      %vm1528 = vcmp.lt.s32.totalorder %v1309, 544
      %vm1529 = vcmp.lt.s32.totalorder %v1310, 544
      %vm1530 = vcmp.lt.s32.totalorder %v1311, 544
      %vm1531 = vcmp.lt.s32.totalorder %v1312, 544
      %vm1532 = vcmp.lt.s32.totalorder %v1313, 544
      %vm1533 = vcmp.lt.s32.totalorder %v1314, 544
      %vm1534 = vcmp.lt.s32.totalorder %v1315, 544
      %vm1535 = vcmp.lt.s32.totalorder %v1316, 544
      %vm1536 = vcmp.lt.s32.totalorder %v1317, 544
      %vm1537 = vcmp.lt.s32.totalorder %v1318, 544
      %vm1538 = vcmp.lt.s32.totalorder %v1319, 544
      %vm1539 = vcmp.lt.s32.totalorder %v1320, 544
      %vm1540 = vcmp.lt.s32.totalorder %v1321, 544
      %vm1541 = vcmp.lt.s32.totalorder %v1322, 544
      %vm1542 = vcmp.lt.s32.totalorder %v1323, 544
      %vm1543 = vcmp.lt.s32.totalorder %v1324, 544
      %vm1544 = vcmp.lt.s32.totalorder %v1325, 544
      %vm1545 = vcmp.lt.s32.totalorder %v1326, 544
      %vm1546 = vcmp.lt.s32.totalorder %v1327, 544
      %vm1547 = vcmp.lt.s32.totalorder %v1328, 544
      %vm1548 = vcmp.lt.s32.totalorder %v1329, 544
      %vm1549 = vcmp.lt.s32.totalorder %v1330, 544
      %vm1550 = vcmp.lt.s32.totalorder %v1331, 544
      %vm1551 = vcmp.lt.s32.totalorder %v1332, 544
      %vm1552 = vcmp.lt.s32.totalorder %v1333, 544
      %vm1553 = vcmp.lt.s32.totalorder %v1334, 544
      %vm1554 = vcmp.lt.s32.totalorder %v1335, 544
      %vm1555 = vcmp.lt.s32.totalorder %v1336, 544
      %vm1556 = vcmp.lt.s32.totalorder %v1337, 544
      %vm1557 = vcmp.lt.s32.totalorder %v1338, 544
      %vm1558 = vcmp.lt.s32.totalorder %v1339, 544
      %vm1559 = vcmp.lt.s32.totalorder %v1340, 544
      %vm1560 = vcmp.lt.s32.totalorder %v1341, 544
      %vm1561 = vcmp.lt.s32.totalorder %v1342, 544
      %vm1562 = vcmp.lt.s32.totalorder %v1343, 544
      %vm1563 = vcmp.lt.s32.totalorder %v1344, 544
      %vm1564 = vcmp.lt.s32.totalorder %v1345, 544
      %vm1565 = vcmp.lt.s32.totalorder %v1346, 544
      %vm1566 = vcmp.lt.s32.totalorder %v1347, 544
      %vm1567 = vcmp.lt.s32.totalorder %v1348, 544
      %vm1568 = vcmp.lt.s32.totalorder %v1349, 544
      %vm1569 = vcmp.lt.s32.totalorder %v1350, 544
      %vm1570 = vcmp.lt.s32.totalorder %v1351, 544
      %vm1571 = vcmp.lt.s32.totalorder %v1352, 544
      %vm1572 = vcmp.lt.s32.totalorder %v1353, 544
      %vm1573 = vcmp.lt.s32.totalorder %v1354, 544
      %vm1574 = vcmp.lt.s32.totalorder %v1355, 544
      %vm1575 = vcmp.lt.s32.totalorder %v1356, 544
      %vm1576 = vcmp.lt.s32.totalorder %v1357, 544
      %vm1577 = vcmp.lt.s32.totalorder %v1358, 544
      %vm1578 = vmand %vm1432, %vm1505
      %vm1579 = vmand %vm1433, %vm1506
      %vm1580 = vmand %vm1434, %vm1507
      %vm1581 = vmand %vm1435, %vm1508
      %vm1582 = vmand %vm1436, %vm1509
      %vm1583 = vmand %vm1437, %vm1510
      %vm1584 = vmand %vm1438, %vm1511
      %vm1585 = vmand %vm1439, %vm1512
      %vm1586 = vmand %vm1440, %vm1513
      %vm1587 = vmand %vm1441, %vm1514
      %vm1588 = vmand %vm1442, %vm1515
      %vm1589 = vmand %vm1443, %vm1516
      %vm1590 = vmand %vm1444, %vm1517
      %vm1591 = vmand %vm1445, %vm1518
      %vm1592 = vmand %vm1446, %vm1519
      %vm1593 = vmand %vm1447, %vm1520
      %vm1594 = vmand %vm1448, %vm1521
      %vm1595 = vmand %vm1449, %vm1522
      %vm1596 = vmand %vm1450, %vm1523
      %vm1597 = vmand %vm1451, %vm1524
      %vm1598 = vmand %vm1452, %vm1525
      %vm1599 = vmand %vm1453, %vm1526
      %vm1600 = vmand %vm1454, %vm1527
      %vm1601 = vmand %vm1455, %vm1528
      %vm1602 = vmand %vm1456, %vm1529
      %vm1603 = vmand %vm1457, %vm1530
      %vm1604 = vmand %vm1458, %vm1531
      %vm1605 = vmand %vm1459, %vm1532
      %vm1606 = vmand %vm1460, %vm1533
      %vm1607 = vmand %vm1461, %vm1534
      %vm1608 = vmand %vm1462, %vm1535
      %vm1609 = vmand %vm1463, %vm1536
      %vm1610 = vmand %vm1464, %vm1537
      %vm1611 = vmand %vm1465, %vm1538
      %vm1612 = vmand %vm1466, %vm1539
      %vm1613 = vmand %vm1467, %vm1540
      %vm1614 = vmand %vm1468, %vm1541
      %vm1615 = vmand %vm1469, %vm1542
      %vm1616 = vmand %vm1470, %vm1543
      %vm1617 = vmand %vm1471, %vm1544
      %vm1618 = vmand %vm1472, %vm1545
      %vm1619 = vmand %vm1473, %vm1546
      %vm1620 = vmand %vm1474, %vm1547
      %vm1621 = vmand %vm1475, %vm1548
      %vm1622 = vmand %vm1476, %vm1549
      %vm1623 = vmand %vm1477, %vm1550
      %vm1624 = vmand %vm1478, %vm1551
      %vm1625 = vmand %vm1479, %vm1552
      %vm1626 = vmand %vm1480, %vm1553
      %vm1627 = vmand %vm1481, %vm1554
      %vm1628 = vmand %vm1482, %vm1555
      %vm1629 = vmand %vm1483, %vm1556
      %vm1630 = vmand %vm1484, %vm1557
      %vm1631 = vmand %vm1485, %vm1558
      %vm1632 = vmand %vm1486, %vm1559
      %vm1633 = vmand %vm1487, %vm1560
      %vm1634 = vmand %vm1488, %vm1561
      %vm1635 = vmand %vm1489, %vm1562
      %vm1636 = vmand %vm1490, %vm1563
      %vm1637 = vmand %vm1491, %vm1564
      %vm1638 = vmand %vm1492, %vm1565
      %vm1639 = vmand %vm1493, %vm1566
      %vm1640 = vmand %vm1494, %vm1567
      %vm1641 = vmand %vm1495, %vm1568
      %vm1642 = vmand %vm1496, %vm1569
      %vm1643 = vmand %vm1497, %vm1570
      %vm1644 = vmand %vm1498, %vm1571
      %vm1645 = vmand %vm1499, %vm1572
      %vm1646 = vmand %vm1500, %vm1573
      %vm1647 = vmand %vm1501, %vm1574
      %vm1648 = vmand %vm1502, %vm1575
      %vm1649 = vmand %vm1503, %vm1576
      %vm1650 = vmand %vm1504, %vm1577
      %vm1651 = vcmp.ge.s32.totalorder %v1359, 1
      %vm1652 = vcmp.ge.s32.totalorder %v1360, 1
      %vm1653 = vcmp.ge.s32.totalorder %v1361, 1
      %vm1654 = vcmp.ge.s32.totalorder %v1362, 1
      %vm1655 = vcmp.ge.s32.totalorder %v1363, 1
      %vm1656 = vcmp.ge.s32.totalorder %v1364, 1
      %vm1657 = vcmp.ge.s32.totalorder %v1365, 1
      %vm1658 = vcmp.ge.s32.totalorder %v1366, 1
      %vm1659 = vcmp.ge.s32.totalorder %v1367, 1
      %vm1660 = vcmp.ge.s32.totalorder %v1368, 1
      %vm1661 = vcmp.ge.s32.totalorder %v1369, 1
      %vm1662 = vcmp.ge.s32.totalorder %v1370, 1
      %vm1663 = vcmp.ge.s32.totalorder %v1371, 1
      %vm1664 = vcmp.ge.s32.totalorder %v1372, 1
      %vm1665 = vcmp.ge.s32.totalorder %v1373, 1
      %vm1666 = vcmp.ge.s32.totalorder %v1374, 1
      %vm1667 = vcmp.ge.s32.totalorder %v1375, 1
      %vm1668 = vcmp.ge.s32.totalorder %v1376, 1
      %vm1669 = vcmp.ge.s32.totalorder %v1377, 1
      %vm1670 = vcmp.ge.s32.totalorder %v1378, 1
      %vm1671 = vcmp.ge.s32.totalorder %v1379, 1
      %vm1672 = vcmp.ge.s32.totalorder %v1380, 1
      %vm1673 = vcmp.ge.s32.totalorder %v1381, 1
      %vm1674 = vcmp.ge.s32.totalorder %v1382, 1
      %vm1675 = vcmp.ge.s32.totalorder %v1383, 1
      %vm1676 = vcmp.ge.s32.totalorder %v1384, 1
      %vm1677 = vcmp.ge.s32.totalorder %v1385, 1
      %vm1678 = vcmp.ge.s32.totalorder %v1386, 1
      %vm1679 = vcmp.ge.s32.totalorder %v1387, 1
      %vm1680 = vcmp.ge.s32.totalorder %v1388, 1
      %vm1681 = vcmp.ge.s32.totalorder %v1389, 1
      %vm1682 = vcmp.ge.s32.totalorder %v1390, 1
      %vm1683 = vcmp.ge.s32.totalorder %v1391, 1
      %vm1684 = vcmp.ge.s32.totalorder %v1392, 1
      %vm1685 = vcmp.ge.s32.totalorder %v1393, 1
      %vm1686 = vcmp.ge.s32.totalorder %v1394, 1
      %vm1687 = vcmp.ge.s32.totalorder %v1395, 1
      %vm1688 = vcmp.ge.s32.totalorder %v1396, 1
      %vm1689 = vcmp.ge.s32.totalorder %v1397, 1
      %vm1690 = vcmp.ge.s32.totalorder %v1398, 1
      %vm1691 = vcmp.ge.s32.totalorder %v1399, 1
      %vm1692 = vcmp.ge.s32.totalorder %v1400, 1
      %vm1693 = vcmp.ge.s32.totalorder %v1401, 1
      %vm1694 = vcmp.ge.s32.totalorder %v1402, 1
      %vm1695 = vcmp.ge.s32.totalorder %v1403, 1
      %vm1696 = vcmp.ge.s32.totalorder %v1404, 1
      %vm1697 = vcmp.ge.s32.totalorder %v1405, 1
      %vm1698 = vcmp.ge.s32.totalorder %v1406, 1
      %vm1699 = vcmp.ge.s32.totalorder %v1407, 1
      %vm1700 = vcmp.ge.s32.totalorder %v1408, 1
      %vm1701 = vcmp.ge.s32.totalorder %v1409, 1
      %vm1702 = vcmp.ge.s32.totalorder %v1410, 1
      %vm1703 = vcmp.ge.s32.totalorder %v1411, 1
      %vm1704 = vcmp.ge.s32.totalorder %v1412, 1
      %vm1705 = vcmp.ge.s32.totalorder %v1413, 1
      %vm1706 = vcmp.ge.s32.totalorder %v1414, 1
      %vm1707 = vcmp.ge.s32.totalorder %v1415, 1
      %vm1708 = vcmp.ge.s32.totalorder %v1416, 1
      %vm1709 = vcmp.ge.s32.totalorder %v1417, 1
      %vm1710 = vcmp.ge.s32.totalorder %v1418, 1
      %vm1711 = vcmp.ge.s32.totalorder %v1419, 1
      %vm1712 = vcmp.ge.s32.totalorder %v1420, 1
      %vm1713 = vcmp.ge.s32.totalorder %v1421, 1
      %vm1714 = vcmp.ge.s32.totalorder %v1422, 1
      %vm1715 = vcmp.ge.s32.totalorder %v1423, 1
      %vm1716 = vcmp.ge.s32.totalorder %v1424, 1
      %vm1717 = vcmp.ge.s32.totalorder %v1425, 1
      %vm1718 = vcmp.ge.s32.totalorder %v1426, 1
      %vm1719 = vcmp.ge.s32.totalorder %v1427, 1
      %vm1720 = vcmp.ge.s32.totalorder %v1428, 1
      %vm1721 = vcmp.ge.s32.totalorder %v1429, 1
      %vm1722 = vcmp.ge.s32.totalorder %v1430, 1
      %vm1723 = vcmp.ge.s32.totalorder %v1431, 1
      %vm1724 = vmand %vm1578, %vm1651
      %vm1725 = vmand %vm1579, %vm1652
      %vm1726 = vmand %vm1580, %vm1653
      %vm1727 = vmand %vm1581, %vm1654
      %vm1728 = vmand %vm1582, %vm1655
      %vm1729 = vmand %vm1583, %vm1656
      %vm1730 = vmand %vm1584, %vm1657
      %vm1731 = vmand %vm1585, %vm1658
      %vm1732 = vmand %vm1586, %vm1659
      %vm1733 = vmand %vm1587, %vm1660
      %vm1734 = vmand %vm1588, %vm1661
      %vm1735 = vmand %vm1589, %vm1662
      %vm1736 = vmand %vm1590, %vm1663
      %vm1737 = vmand %vm1591, %vm1664
      %vm1738 = vmand %vm1592, %vm1665
      %vm1739 = vmand %vm1593, %vm1666
      %vm1740 = vmand %vm1594, %vm1667
      %vm1741 = vmand %vm1595, %vm1668
      %vm1742 = vmand %vm1596, %vm1669
      %vm1743 = vmand %vm1597, %vm1670
      %vm1744 = vmand %vm1598, %vm1671
      %vm1745 = vmand %vm1599, %vm1672
      %vm1746 = vmand %vm1600, %vm1673
      %vm1747 = vmand %vm1601, %vm1674
      %vm1748 = vmand %vm1602, %vm1675
      %vm1749 = vmand %vm1603, %vm1676
      %vm1750 = vmand %vm1604, %vm1677
      %vm1751 = vmand %vm1605, %vm1678
      %vm1752 = vmand %vm1606, %vm1679
      %vm1753 = vmand %vm1607, %vm1680
      %vm1754 = vmand %vm1608, %vm1681
      %vm1755 = vmand %vm1609, %vm1682
      %vm1756 = vmand %vm1610, %vm1683
      %vm1757 = vmand %vm1611, %vm1684
      %vm1758 = vmand %vm1612, %vm1685
      %vm1759 = vmand %vm1613, %vm1686
      %vm1760 = vmand %vm1614, %vm1687
      %vm1761 = vmand %vm1615, %vm1688
      %vm1762 = vmand %vm1616, %vm1689
      %vm1763 = vmand %vm1617, %vm1690
      %vm1764 = vmand %vm1618, %vm1691
      %vm1765 = vmand %vm1619, %vm1692
      %vm1766 = vmand %vm1620, %vm1693
      %vm1767 = vmand %vm1621, %vm1694
      %vm1768 = vmand %vm1622, %vm1695
      %vm1769 = vmand %vm1623, %vm1696
      %vm1770 = vmand %vm1624, %vm1697
      %vm1771 = vmand %vm1625, %vm1698
      %vm1772 = vmand %vm1626, %vm1699
      %vm1773 = vmand %vm1627, %vm1700
      %vm1774 = vmand %vm1628, %vm1701
      %vm1775 = vmand %vm1629, %vm1702
      %vm1776 = vmand %vm1630, %vm1703
      %vm1777 = vmand %vm1631, %vm1704
      %vm1778 = vmand %vm1632, %vm1705
      %vm1779 = vmand %vm1633, %vm1706
      %vm1780 = vmand %vm1634, %vm1707
      %vm1781 = vmand %vm1635, %vm1708
      %vm1782 = vmand %vm1636, %vm1709
      %vm1783 = vmand %vm1637, %vm1710
      %vm1784 = vmand %vm1638, %vm1711
      %vm1785 = vmand %vm1639, %vm1712
      %vm1786 = vmand %vm1640, %vm1713
      %vm1787 = vmand %vm1641, %vm1714
      %vm1788 = vmand %vm1642, %vm1715
      %vm1789 = vmand %vm1643, %vm1716
      %vm1790 = vmand %vm1644, %vm1717
      %vm1791 = vmand %vm1645, %vm1718
      %vm1792 = vmand %vm1646, %vm1719
      %vm1793 = vmand %vm1647, %vm1720
      %vm1794 = vmand %vm1648, %vm1721
      %vm1795 = vmand %vm1649, %vm1722
      %vm1796 = vmand %vm1650, %vm1723
      %vm1797 = vcmp.le.s32.totalorder %v1359, 16
      %vm1798 = vcmp.le.s32.totalorder %v1360, 16
      %vm1799 = vcmp.le.s32.totalorder %v1361, 16
      %vm1800 = vcmp.le.s32.totalorder %v1362, 16
      %vm1801 = vcmp.le.s32.totalorder %v1363, 16
      %vm1802 = vcmp.le.s32.totalorder %v1364, 16
      %vm1803 = vcmp.le.s32.totalorder %v1365, 16
      %vm1804 = vcmp.le.s32.totalorder %v1366, 16
      %vm1805 = vcmp.le.s32.totalorder %v1367, 16
      %vm1806 = vcmp.le.s32.totalorder %v1368, 16
      %vm1807 = vcmp.le.s32.totalorder %v1369, 16
      %vm1808 = vcmp.le.s32.totalorder %v1370, 16
      %vm1809 = vcmp.le.s32.totalorder %v1371, 16
      %vm1810 = vcmp.le.s32.totalorder %v1372, 16
      %vm1811 = vcmp.le.s32.totalorder %v1373, 16
      %vm1812 = vcmp.le.s32.totalorder %v1374, 16
      %vm1813 = vcmp.le.s32.totalorder %v1375, 16
      %vm1814 = vcmp.le.s32.totalorder %v1376, 16
      %vm1815 = vcmp.le.s32.totalorder %v1377, 16
      %vm1816 = vcmp.le.s32.totalorder %v1378, 16
      %vm1817 = vcmp.le.s32.totalorder %v1379, 16
      %vm1818 = vcmp.le.s32.totalorder %v1380, 16
      %vm1819 = vcmp.le.s32.totalorder %v1381, 16
      %vm1820 = vcmp.le.s32.totalorder %v1382, 16
      %vm1821 = vcmp.le.s32.totalorder %v1383, 16
      %vm1822 = vcmp.le.s32.totalorder %v1384, 16
      %vm1823 = vcmp.le.s32.totalorder %v1385, 16
      %vm1824 = vcmp.le.s32.totalorder %v1386, 16
      %vm1825 = vcmp.le.s32.totalorder %v1387, 16
      %vm1826 = vcmp.le.s32.totalorder %v1388, 16
      %vm1827 = vcmp.le.s32.totalorder %v1389, 16
      %vm1828 = vcmp.le.s32.totalorder %v1390, 16
      %vm1829 = vcmp.le.s32.totalorder %v1391, 16
      %vm1830 = vcmp.le.s32.totalorder %v1392, 16
      %vm1831 = vcmp.le.s32.totalorder %v1393, 16
      %vm1832 = vcmp.le.s32.totalorder %v1394, 16
      %vm1833 = vcmp.le.s32.totalorder %v1395, 16
      %vm1834 = vcmp.le.s32.totalorder %v1396, 16
      %vm1835 = vcmp.le.s32.totalorder %v1397, 16
      %vm1836 = vcmp.le.s32.totalorder %v1398, 16
      %vm1837 = vcmp.le.s32.totalorder %v1399, 16
      %vm1838 = vcmp.le.s32.totalorder %v1400, 16
      %vm1839 = vcmp.le.s32.totalorder %v1401, 16
      %vm1840 = vcmp.le.s32.totalorder %v1402, 16
      %vm1841 = vcmp.le.s32.totalorder %v1403, 16
      %vm1842 = vcmp.le.s32.totalorder %v1404, 16
      %vm1843 = vcmp.le.s32.totalorder %v1405, 16
      %vm1844 = vcmp.le.s32.totalorder %v1406, 16
      %vm1845 = vcmp.le.s32.totalorder %v1407, 16
      %vm1846 = vcmp.le.s32.totalorder %v1408, 16
      %vm1847 = vcmp.le.s32.totalorder %v1409, 16
      %vm1848 = vcmp.le.s32.totalorder %v1410, 16
      %vm1849 = vcmp.le.s32.totalorder %v1411, 16
      %vm1850 = vcmp.le.s32.totalorder %v1412, 16
      %vm1851 = vcmp.le.s32.totalorder %v1413, 16
      %vm1852 = vcmp.le.s32.totalorder %v1414, 16
      %vm1853 = vcmp.le.s32.totalorder %v1415, 16
      %vm1854 = vcmp.le.s32.totalorder %v1416, 16
      %vm1855 = vcmp.le.s32.totalorder %v1417, 16
      %vm1856 = vcmp.le.s32.totalorder %v1418, 16
      %vm1857 = vcmp.le.s32.totalorder %v1419, 16
      %vm1858 = vcmp.le.s32.totalorder %v1420, 16
      %vm1859 = vcmp.le.s32.totalorder %v1421, 16
      %vm1860 = vcmp.le.s32.totalorder %v1422, 16
      %vm1861 = vcmp.le.s32.totalorder %v1423, 16
      %vm1862 = vcmp.le.s32.totalorder %v1424, 16
      %vm1863 = vcmp.le.s32.totalorder %v1425, 16
      %vm1864 = vcmp.le.s32.totalorder %v1426, 16
      %vm1865 = vcmp.le.s32.totalorder %v1427, 16
      %vm1866 = vcmp.le.s32.totalorder %v1428, 16
      %vm1867 = vcmp.le.s32.totalorder %v1429, 16
      %vm1868 = vcmp.le.s32.totalorder %v1430, 16
      %vm1869 = vcmp.le.s32.totalorder %v1431, 16
      %vm1870 = vmand %vm1724, %vm1797
      %vm1871 = vmand %vm1725, %vm1798
      %vm1872 = vmand %vm1726, %vm1799
      %vm1873 = vmand %vm1727, %vm1800
      %vm1874 = vmand %vm1728, %vm1801
      %vm1875 = vmand %vm1729, %vm1802
      %vm1876 = vmand %vm1730, %vm1803
      %vm1877 = vmand %vm1731, %vm1804
      %vm1878 = vmand %vm1732, %vm1805
      %vm1879 = vmand %vm1733, %vm1806
      %vm1880 = vmand %vm1734, %vm1807
      %vm1881 = vmand %vm1735, %vm1808
      %vm1882 = vmand %vm1736, %vm1809
      %vm1883 = vmand %vm1737, %vm1810
      %vm1884 = vmand %vm1738, %vm1811
      %vm1885 = vmand %vm1739, %vm1812
      %vm1886 = vmand %vm1740, %vm1813
      %vm1887 = vmand %vm1741, %vm1814
      %vm1888 = vmand %vm1742, %vm1815
      %vm1889 = vmand %vm1743, %vm1816
      %vm1890 = vmand %vm1744, %vm1817
      %vm1891 = vmand %vm1745, %vm1818
      %vm1892 = vmand %vm1746, %vm1819
      %vm1893 = vmand %vm1747, %vm1820
      %vm1894 = vmand %vm1748, %vm1821
      %vm1895 = vmand %vm1749, %vm1822
      %vm1896 = vmand %vm1750, %vm1823
      %vm1897 = vmand %vm1751, %vm1824
      %vm1898 = vmand %vm1752, %vm1825
      %vm1899 = vmand %vm1753, %vm1826
      %vm1900 = vmand %vm1754, %vm1827
      %vm1901 = vmand %vm1755, %vm1828
      %vm1902 = vmand %vm1756, %vm1829
      %vm1903 = vmand %vm1757, %vm1830
      %vm1904 = vmand %vm1758, %vm1831
      %vm1905 = vmand %vm1759, %vm1832
      %vm1906 = vmand %vm1760, %vm1833
      %vm1907 = vmand %vm1761, %vm1834
      %vm1908 = vmand %vm1762, %vm1835
      %vm1909 = vmand %vm1763, %vm1836
      %vm1910 = vmand %vm1764, %vm1837
      %vm1911 = vmand %vm1765, %vm1838
      %vm1912 = vmand %vm1766, %vm1839
      %vm1913 = vmand %vm1767, %vm1840
      %vm1914 = vmand %vm1768, %vm1841
      %vm1915 = vmand %vm1769, %vm1842
      %vm1916 = vmand %vm1770, %vm1843
      %vm1917 = vmand %vm1771, %vm1844
      %vm1918 = vmand %vm1772, %vm1845
      %vm1919 = vmand %vm1773, %vm1846
      %vm1920 = vmand %vm1774, %vm1847
      %vm1921 = vmand %vm1775, %vm1848
      %vm1922 = vmand %vm1776, %vm1849
      %vm1923 = vmand %vm1777, %vm1850
      %vm1924 = vmand %vm1778, %vm1851
      %vm1925 = vmand %vm1779, %vm1852
      %vm1926 = vmand %vm1780, %vm1853
      %vm1927 = vmand %vm1781, %vm1854
      %vm1928 = vmand %vm1782, %vm1855
      %vm1929 = vmand %vm1783, %vm1856
      %vm1930 = vmand %vm1784, %vm1857
      %vm1931 = vmand %vm1785, %vm1858
      %vm1932 = vmand %vm1786, %vm1859
      %vm1933 = vmand %vm1787, %vm1860
      %vm1934 = vmand %vm1788, %vm1861
      %vm1935 = vmand %vm1789, %vm1862
      %vm1936 = vmand %vm1790, %vm1863
      %vm1937 = vmand %vm1791, %vm1864
      %vm1938 = vmand %vm1792, %vm1865
      %vm1939 = vmand %vm1793, %vm1866
      %vm1940 = vmand %vm1794, %vm1867
      %vm1941 = vmand %vm1795, %vm1868
      %vm1942 = vmand %vm1796, %vm1869
      %v1943 = vsel %vm1870, 1, 0
      %v1944 = vsel %vm1871, 1, 0
      %v1945 = vsel %vm1872, 1, 0
      %v1946 = vsel %vm1873, 1, 0
      %v1947 = vsel %vm1874, 1, 0
      %v1948 = vsel %vm1875, 1, 0
      %v1949 = vsel %vm1876, 1, 0
      %v1950 = vsel %vm1877, 1, 0
      %v1951 = vsel %vm1878, 1, 0
      %v1952 = vsel %vm1879, 1, 0
      %v1953 = vsel %vm1880, 1, 0
      %v1954 = vsel %vm1881, 1, 0
      %v1955 = vsel %vm1882, 1, 0
      %v1956 = vsel %vm1883, 1, 0
      %v1957 = vsel %vm1884, 1, 0
      %v1958 = vsel %vm1885, 1, 0
      %v1959 = vsel %vm1886, 1, 0
      %v1960 = vsel %vm1887, 1, 0
      %v1961 = vsel %vm1888, 1, 0
      %v1962 = vsel %vm1889, 1, 0
      %v1963 = vsel %vm1890, 1, 0
      %v1964 = vsel %vm1891, 1, 0
      %v1965 = vsel %vm1892, 1, 0
      %v1966 = vsel %vm1893, 1, 0
      %v1967 = vsel %vm1894, 1, 0
      %v1968 = vsel %vm1895, 1, 0
      %v1969 = vsel %vm1896, 1, 0
      %v1970 = vsel %vm1897, 1, 0
      %v1971 = vsel %vm1898, 1, 0
      %v1972 = vsel %vm1899, 1, 0
      %v1973 = vsel %vm1900, 1, 0
      %v1974 = vsel %vm1901, 1, 0
      %v1975 = vsel %vm1902, 1, 0
      %v1976 = vsel %vm1903, 1, 0
      %v1977 = vsel %vm1904, 1, 0
      %v1978 = vsel %vm1905, 1, 0
      %v1979 = vsel %vm1906, 1, 0
      %v1980 = vsel %vm1907, 1, 0
      %v1981 = vsel %vm1908, 1, 0
      %v1982 = vsel %vm1909, 1, 0
      %v1983 = vsel %vm1910, 1, 0
      %v1984 = vsel %vm1911, 1, 0
      %v1985 = vsel %vm1912, 1, 0
      %v1986 = vsel %vm1913, 1, 0
      %v1987 = vsel %vm1914, 1, 0
      %v1988 = vsel %vm1915, 1, 0
      %v1989 = vsel %vm1916, 1, 0
      %v1990 = vsel %vm1917, 1, 0
      %v1991 = vsel %vm1918, 1, 0
      %v1992 = vsel %vm1919, 1, 0
      %v1993 = vsel %vm1920, 1, 0
      %v1994 = vsel %vm1921, 1, 0
      %v1995 = vsel %vm1922, 1, 0
      %v1996 = vsel %vm1923, 1, 0
      %v1997 = vsel %vm1924, 1, 0
      %v1998 = vsel %vm1925, 1, 0
      %v1999 = vsel %vm1926, 1, 0
      %v2000 = vsel %vm1927, 1, 0
      %v2001 = vsel %vm1928, 1, 0
      %v2002 = vsel %vm1929, 1, 0
      %v2003 = vsel %vm1930, 1, 0
      %v2004 = vsel %vm1931, 1, 0
      %v2005 = vsel %vm1932, 1, 0
      %v2006 = vsel %vm1933, 1, 0
      %v2007 = vsel %vm1934, 1, 0
      %v2008 = vsel %vm1935, 1, 0
      %v2009 = vsel %vm1936, 1, 0
      %v2010 = vsel %vm1937, 1, 0
      %v2011 = vsel %vm1938, 1, 0
      %v2012 = vsel %vm1939, 1, 0
      %v2013 = vsel %vm1940, 1, 0
      %v2014 = vsel %vm1941, 1, 0
      %v2015 = vsel %vm1942, 1, 0
      %vm2016 = vcmp.eq.s32.totalorder %v1943, 1
      %vm2017 = vcmp.eq.s32.totalorder %v1944, 1
      %vm2018 = vcmp.eq.s32.totalorder %v1945, 1
      %vm2019 = vcmp.eq.s32.totalorder %v1946, 1
      %vm2020 = vcmp.eq.s32.totalorder %v1947, 1
      %vm2021 = vcmp.eq.s32.totalorder %v1948, 1
      %vm2022 = vcmp.eq.s32.totalorder %v1949, 1
      %vm2023 = vcmp.eq.s32.totalorder %v1950, 1
      %vm2024 = vcmp.eq.s32.totalorder %v1951, 1
      %vm2025 = vcmp.eq.s32.totalorder %v1952, 1
      %vm2026 = vcmp.eq.s32.totalorder %v1953, 1
      %vm2027 = vcmp.eq.s32.totalorder %v1954, 1
      %vm2028 = vcmp.eq.s32.totalorder %v1955, 1
      %vm2029 = vcmp.eq.s32.totalorder %v1956, 1
      %vm2030 = vcmp.eq.s32.totalorder %v1957, 1
      %vm2031 = vcmp.eq.s32.totalorder %v1958, 1
      %vm2032 = vcmp.eq.s32.totalorder %v1959, 1
      %vm2033 = vcmp.eq.s32.totalorder %v1960, 1
      %vm2034 = vcmp.eq.s32.totalorder %v1961, 1
      %vm2035 = vcmp.eq.s32.totalorder %v1962, 1
      %vm2036 = vcmp.eq.s32.totalorder %v1963, 1
      %vm2037 = vcmp.eq.s32.totalorder %v1964, 1
      %vm2038 = vcmp.eq.s32.totalorder %v1965, 1
      %vm2039 = vcmp.eq.s32.totalorder %v1966, 1
      %vm2040 = vcmp.eq.s32.totalorder %v1967, 1
      %vm2041 = vcmp.eq.s32.totalorder %v1968, 1
      %vm2042 = vcmp.eq.s32.totalorder %v1969, 1
      %vm2043 = vcmp.eq.s32.totalorder %v1970, 1
      %vm2044 = vcmp.eq.s32.totalorder %v1971, 1
      %vm2045 = vcmp.eq.s32.totalorder %v1972, 1
      %vm2046 = vcmp.eq.s32.totalorder %v1973, 1
      %vm2047 = vcmp.eq.s32.totalorder %v1974, 1
      %vm2048 = vcmp.eq.s32.totalorder %v1975, 1
      %vm2049 = vcmp.eq.s32.totalorder %v1976, 1
      %vm2050 = vcmp.eq.s32.totalorder %v1977, 1
      %vm2051 = vcmp.eq.s32.totalorder %v1978, 1
      %vm2052 = vcmp.eq.s32.totalorder %v1979, 1
      %vm2053 = vcmp.eq.s32.totalorder %v1980, 1
      %vm2054 = vcmp.eq.s32.totalorder %v1981, 1
      %vm2055 = vcmp.eq.s32.totalorder %v1982, 1
      %vm2056 = vcmp.eq.s32.totalorder %v1983, 1
      %vm2057 = vcmp.eq.s32.totalorder %v1984, 1
      %vm2058 = vcmp.eq.s32.totalorder %v1985, 1
      %vm2059 = vcmp.eq.s32.totalorder %v1986, 1
      %vm2060 = vcmp.eq.s32.totalorder %v1987, 1
      %vm2061 = vcmp.eq.s32.totalorder %v1988, 1
      %vm2062 = vcmp.eq.s32.totalorder %v1989, 1
      %vm2063 = vcmp.eq.s32.totalorder %v1990, 1
      %vm2064 = vcmp.eq.s32.totalorder %v1991, 1
      %vm2065 = vcmp.eq.s32.totalorder %v1992, 1
      %vm2066 = vcmp.eq.s32.totalorder %v1993, 1
      %vm2067 = vcmp.eq.s32.totalorder %v1994, 1
      %vm2068 = vcmp.eq.s32.totalorder %v1995, 1
      %vm2069 = vcmp.eq.s32.totalorder %v1996, 1
      %vm2070 = vcmp.eq.s32.totalorder %v1997, 1
      %vm2071 = vcmp.eq.s32.totalorder %v1998, 1
      %vm2072 = vcmp.eq.s32.totalorder %v1999, 1
      %vm2073 = vcmp.eq.s32.totalorder %v2000, 1
      %vm2074 = vcmp.eq.s32.totalorder %v2001, 1
      %vm2075 = vcmp.eq.s32.totalorder %v2002, 1
      %vm2076 = vcmp.eq.s32.totalorder %v2003, 1
      %vm2077 = vcmp.eq.s32.totalorder %v2004, 1
      %vm2078 = vcmp.eq.s32.totalorder %v2005, 1
      %vm2079 = vcmp.eq.s32.totalorder %v2006, 1
      %vm2080 = vcmp.eq.s32.totalorder %v2007, 1
      %vm2081 = vcmp.eq.s32.totalorder %v2008, 1
      %vm2082 = vcmp.eq.s32.totalorder %v2009, 1
      %vm2083 = vcmp.eq.s32.totalorder %v2010, 1
      %vm2084 = vcmp.eq.s32.totalorder %v2011, 1
      %vm2085 = vcmp.eq.s32.totalorder %v2012, 1
      %vm2086 = vcmp.eq.s32.totalorder %v2013, 1
      %vm2087 = vcmp.eq.s32.totalorder %v2014, 1
      %vm2088 = vcmp.eq.s32.totalorder %v2015, 1
      %v2089 = vsel %vm2016, %v1212, 0.0
      %v2090 = vsel %vm2017, %v1213, 0.0
      %v2091 = vsel %vm2018, %v1214, 0.0
      %v2092 = vsel %vm2019, %v1215, 0.0
      %v2093 = vsel %vm2020, %v1216, 0.0
      %v2094 = vsel %vm2021, %v1217, 0.0
      %v2095 = vsel %vm2022, %v1218, 0.0
      %v2096 = vsel %vm2023, %v1219, 0.0
      %v2097 = vsel %vm2024, %v1220, 0.0
      %v2098 = vsel %vm2025, %v1221, 0.0
      %v2099 = vsel %vm2026, %v1222, 0.0
      %v2100 = vsel %vm2027, %v1223, 0.0
      %v2101 = vsel %vm2028, %v1224, 0.0
      %v2102 = vsel %vm2029, %v1225, 0.0
      %v2103 = vsel %vm2030, %v1226, 0.0
      %v2104 = vsel %vm2031, %v1227, 0.0
      %v2105 = vsel %vm2032, %v1228, 0.0
      %v2106 = vsel %vm2033, %v1229, 0.0
      %v2107 = vsel %vm2034, %v1230, 0.0
      %v2108 = vsel %vm2035, %v1231, 0.0
      %v2109 = vsel %vm2036, %v1232, 0.0
      %v2110 = vsel %vm2037, %v1233, 0.0
      %v2111 = vsel %vm2038, %v1234, 0.0
      %v2112 = vsel %vm2039, %v1235, 0.0
      %v2113 = vsel %vm2040, %v1236, 0.0
      %v2114 = vsel %vm2041, %v1237, 0.0
      %v2115 = vsel %vm2042, %v1238, 0.0
      %v2116 = vsel %vm2043, %v1239, 0.0
      %v2117 = vsel %vm2044, %v1240, 0.0
      %v2118 = vsel %vm2045, %v1241, 0.0
      %v2119 = vsel %vm2046, %v1242, 0.0
      %v2120 = vsel %vm2047, %v1243, 0.0
      %v2121 = vsel %vm2048, %v1244, 0.0
      %v2122 = vsel %vm2049, %v1245, 0.0
      %v2123 = vsel %vm2050, %v1246, 0.0
      %v2124 = vsel %vm2051, %v1247, 0.0
      %v2125 = vsel %vm2052, %v1248, 0.0
      %v2126 = vsel %vm2053, %v1249, 0.0
      %v2127 = vsel %vm2054, %v1250, 0.0
      %v2128 = vsel %vm2055, %v1251, 0.0
      %v2129 = vsel %vm2056, %v1252, 0.0
      %v2130 = vsel %vm2057, %v1253, 0.0
      %v2131 = vsel %vm2058, %v1254, 0.0
      %v2132 = vsel %vm2059, %v1255, 0.0
      %v2133 = vsel %vm2060, %v1256, 0.0
      %v2134 = vsel %vm2061, %v1257, 0.0
      %v2135 = vsel %vm2062, %v1258, 0.0
      %v2136 = vsel %vm2063, %v1259, 0.0
      %v2137 = vsel %vm2064, %v1260, 0.0
      %v2138 = vsel %vm2065, %v1261, 0.0
      %v2139 = vsel %vm2066, %v1262, 0.0
      %v2140 = vsel %vm2067, %v1263, 0.0
      %v2141 = vsel %vm2068, %v1264, 0.0
      %v2142 = vsel %vm2069, %v1265, 0.0
      %v2143 = vsel %vm2070, %v1266, 0.0
      %v2144 = vsel %vm2071, %v1267, 0.0
      %v2145 = vsel %vm2072, %v1268, 0.0
      %v2146 = vsel %vm2073, %v1269, 0.0
      %v2147 = vsel %vm2074, %v1270, 0.0
      %v2148 = vsel %vm2075, %v1271, 0.0
      %v2149 = vsel %vm2076, %v1272, 0.0
      %v2150 = vsel %vm2077, %v1273, 0.0
      %v2151 = vsel %vm2078, %v1274, 0.0
      %v2152 = vsel %vm2079, %v1275, 0.0
      %v2153 = vsel %vm2080, %v1276, 0.0
      %v2154 = vsel %vm2081, %v1277, 0.0
      %v2155 = vsel %vm2082, %v1278, 0.0
      %v2156 = vsel %vm2083, %v1279, 0.0
      %v2157 = vsel %vm2084, %v1280, 0.0
      %v2158 = vsel %vm2085, %v1281, 0.0
      %v2159 = vsel %vm2086, %v1282, 0.0
      %v2160 = vsel %vm2087, %v1283, 0.0
      %v2161 = vsel %vm2088, %v1284, 0.0
      %v2162 = vpack.c.bf16 %v2089, %v2089
      %v2163 = vpack.c.bf16 %v2090, %v2090
      %v2164 = vpack.c.bf16 %v2091, %v2091
      %v2165 = vpack.c.bf16 %v2092, %v2092
      %v2166 = vpack.c.bf16 %v2093, %v2093
      %v2167 = vpack.c.bf16 %v2094, %v2094
      %v2168 = vpack.c.bf16 %v2095, %v2095
      %v2169 = vpack.c.bf16 %v2096, %v2096
      %v2170 = vpack.c.bf16 %v2097, %v2097
      %v2171 = vpack.c.bf16 %v2098, %v2098
      %v2172 = vpack.c.bf16 %v2099, %v2099
      %v2173 = vpack.c.bf16 %v2100, %v2100
      %v2174 = vpack.c.bf16 %v2101, %v2101
      %v2175 = vpack.c.bf16 %v2102, %v2102
      %v2176 = vpack.c.bf16 %v2103, %v2103
      %v2177 = vpack.c.bf16 %v2104, %v2104
      %v2178 = vpack.c.bf16 %v2105, %v2105
      %v2179 = vpack.c.bf16 %v2106, %v2106
      %v2180 = vpack.c.bf16 %v2107, %v2107
      %v2181 = vpack.c.bf16 %v2108, %v2108
      %v2182 = vpack.c.bf16 %v2109, %v2109
      %v2183 = vpack.c.bf16 %v2110, %v2110
      %v2184 = vpack.c.bf16 %v2111, %v2111
      %v2185 = vpack.c.bf16 %v2112, %v2112
      %v2186 = vpack.c.bf16 %v2113, %v2113
      %v2187 = vpack.c.bf16 %v2114, %v2114
      %v2188 = vpack.c.bf16 %v2115, %v2115
      %v2189 = vpack.c.bf16 %v2116, %v2116
      %v2190 = vpack.c.bf16 %v2117, %v2117
      %v2191 = vpack.c.bf16 %v2118, %v2118
      %v2192 = vpack.c.bf16 %v2119, %v2119
      %v2193 = vpack.c.bf16 %v2120, %v2120
      %v2194 = vpack.c.bf16 %v2121, %v2121
      %v2195 = vpack.c.bf16 %v2122, %v2122
      %v2196 = vpack.c.bf16 %v2123, %v2123
      %v2197 = vpack.c.bf16 %v2124, %v2124
      %v2198 = vpack.c.bf16 %v2125, %v2125
      %v2199 = vpack.c.bf16 %v2126, %v2126
      %v2200 = vpack.c.bf16 %v2127, %v2127
      %v2201 = vpack.c.bf16 %v2128, %v2128
      %v2202 = vpack.c.bf16 %v2129, %v2129
      %v2203 = vpack.c.bf16 %v2130, %v2130
      %v2204 = vpack.c.bf16 %v2131, %v2131
      %v2205 = vpack.c.bf16 %v2132, %v2132
      %v2206 = vpack.c.bf16 %v2133, %v2133
      %v2207 = vpack.c.bf16 %v2134, %v2134
      %v2208 = vpack.c.bf16 %v2135, %v2135
      %v2209 = vpack.c.bf16 %v2136, %v2136
      %v2210 = vpack.c.bf16 %v2137, %v2137
      %v2211 = vpack.c.bf16 %v2138, %v2138
      %v2212 = vpack.c.bf16 %v2139, %v2139
      %v2213 = vpack.c.bf16 %v2140, %v2140
      %v2214 = vpack.c.bf16 %v2141, %v2141
      %v2215 = vpack.c.bf16 %v2142, %v2142
      %v2216 = vpack.c.bf16 %v2143, %v2143
      %v2217 = vpack.c.bf16 %v2144, %v2144
      %v2218 = vpack.c.bf16 %v2145, %v2145
      %v2219 = vpack.c.bf16 %v2146, %v2146
      %v2220 = vpack.c.bf16 %v2147, %v2147
      %v2221 = vpack.c.bf16 %v2148, %v2148
      %v2222 = vpack.c.bf16 %v2149, %v2149
      %v2223 = vpack.c.bf16 %v2150, %v2150
      %v2224 = vpack.c.bf16 %v2151, %v2151
      %v2225 = vpack.c.bf16 %v2152, %v2152
      %v2226 = vpack.c.bf16 %v2153, %v2153
      %v2227 = vpack.c.bf16 %v2154, %v2154
      %v2228 = vpack.c.bf16 %v2155, %v2155
      %v2229 = vpack.c.bf16 %v2156, %v2156
      %v2230 = vpack.c.bf16 %v2157, %v2157
      %v2231 = vpack.c.bf16 %v2158, %v2158
      %v2232 = vpack.c.bf16 %v2159, %v2159
      %v2233 = vpack.c.bf16 %v2160, %v2160
      %v2234 = vpack.c.bf16 %v2161, %v2161
      %v2307 = vunpack.c.l.b16 %v2162
      %v2308 = vunpack.c.l.b16 %v2163
      %v2309 = vunpack.c.l.b16 %v2164
      %v2310 = vunpack.c.l.b16 %v2165
      %v2311 = vunpack.c.l.b16 %v2166
      %v2312 = vunpack.c.l.b16 %v2167
      %v2313 = vunpack.c.l.b16 %v2168
      %v2314 = vunpack.c.l.b16 %v2169
      %v2315 = vunpack.c.l.b16 %v2170
      %v2316 = vunpack.c.l.b16 %v2171
      %v2317 = vunpack.c.l.b16 %v2172
      %v2318 = vunpack.c.l.b16 %v2173
      %v2319 = vunpack.c.l.b16 %v2174
      %v2320 = vunpack.c.l.b16 %v2175
      %v2321 = vunpack.c.l.b16 %v2176
      %v2322 = vunpack.c.l.b16 %v2177
      %v2323 = vunpack.c.l.b16 %v2178
      %v2324 = vunpack.c.l.b16 %v2179
      %v2325 = vunpack.c.l.b16 %v2180
      %v2326 = vunpack.c.l.b16 %v2181
      %v2327 = vunpack.c.l.b16 %v2182
      %v2328 = vunpack.c.l.b16 %v2183
      %v2329 = vunpack.c.l.b16 %v2184
      %v2330 = vunpack.c.l.b16 %v2185
      %v2331 = vunpack.c.l.b16 %v2186
      %v2332 = vunpack.c.l.b16 %v2187
      %v2333 = vunpack.c.l.b16 %v2188
      %v2334 = vunpack.c.l.b16 %v2189
      %v2335 = vunpack.c.l.b16 %v2190
      %v2336 = vunpack.c.l.b16 %v2191
      %v2337 = vunpack.c.l.b16 %v2192
      %v2338 = vunpack.c.l.b16 %v2193
      %v2339 = vunpack.c.l.b16 %v2194
      %v2340 = vunpack.c.l.b16 %v2195
      %v2341 = vunpack.c.l.b16 %v2196
      %v2342 = vunpack.c.l.b16 %v2197
      %v2343 = vunpack.c.l.b16 %v2198
      %v2344 = vunpack.c.l.b16 %v2199
      %v2345 = vunpack.c.l.b16 %v2200
      %v2346 = vunpack.c.l.b16 %v2201
      %v2347 = vunpack.c.l.b16 %v2202
      %v2348 = vunpack.c.l.b16 %v2203
      %v2349 = vunpack.c.l.b16 %v2204
      %v2350 = vunpack.c.l.b16 %v2205
      %v2351 = vunpack.c.l.b16 %v2206
      %v2352 = vunpack.c.l.b16 %v2207
      %v2353 = vunpack.c.l.b16 %v2208
      %v2354 = vunpack.c.l.b16 %v2209
      %v2355 = vunpack.c.l.b16 %v2210
      %v2356 = vunpack.c.l.b16 %v2211
      %v2357 = vunpack.c.l.b16 %v2212
      %v2358 = vunpack.c.l.b16 %v2213
      %v2359 = vunpack.c.l.b16 %v2214
      %v2360 = vunpack.c.l.b16 %v2215
      %v2361 = vunpack.c.l.b16 %v2216
      %v2362 = vunpack.c.l.b16 %v2217
      %v2363 = vunpack.c.l.b16 %v2218
      %v2364 = vunpack.c.l.b16 %v2219
      %v2365 = vunpack.c.l.b16 %v2220
      %v2366 = vunpack.c.l.b16 %v2221
      %v2367 = vunpack.c.l.b16 %v2222
      %v2368 = vunpack.c.l.b16 %v2223
      %v2369 = vunpack.c.l.b16 %v2224
      %v2370 = vunpack.c.l.b16 %v2225
      %v2371 = vunpack.c.l.b16 %v2226
      %v2372 = vunpack.c.l.b16 %v2227
      %v2373 = vunpack.c.l.b16 %v2228
      %v2374 = vunpack.c.l.b16 %v2229
      %v2375 = vunpack.c.l.b16 %v2230
      %v2376 = vunpack.c.l.b16 %v2231
      %v2377 = vunpack.c.l.b16 %v2232
      %v2378 = vunpack.c.l.b16 %v2233
      %v2379 = vpack.c.b16 %v2308, %v2307
      %v2380 = vpack.c.b16 %v2310, %v2309
      %v2381 = vpack.c.b16 %v2312, %v2311
      %v2382 = vpack.c.b16 %v2314, %v2313
      %v2383 = vpack.c.b16 %v2316, %v2315
      %v2384 = vpack.c.b16 %v2318, %v2317
      %v2385 = vpack.c.b16 %v2320, %v2319
      %v2386 = vpack.c.b16 %v2322, %v2321
      %v2387 = vpack.c.b16 %v2324, %v2323
      %v2388 = vpack.c.b16 %v2326, %v2325
      %v2389 = vpack.c.b16 %v2328, %v2327
      %v2390 = vpack.c.b16 %v2330, %v2329
      %v2391 = vpack.c.b16 %v2332, %v2331
      %v2392 = vpack.c.b16 %v2334, %v2333
      %v2393 = vpack.c.b16 %v2336, %v2335
      %v2394 = vpack.c.b16 %v2338, %v2337
      %v2395 = vpack.c.b16 %v2340, %v2339
      %v2396 = vpack.c.b16 %v2342, %v2341
      %v2397 = vpack.c.b16 %v2344, %v2343
      %v2398 = vpack.c.b16 %v2346, %v2345
      %v2399 = vpack.c.b16 %v2348, %v2347
      %v2400 = vpack.c.b16 %v2350, %v2349
      %v2401 = vpack.c.b16 %v2352, %v2351
      %v2402 = vpack.c.b16 %v2354, %v2353
      %v2403 = vpack.c.b16 %v2356, %v2355
      %v2404 = vpack.c.b16 %v2358, %v2357
      %v2405 = vpack.c.b16 %v2360, %v2359
      %v2406 = vpack.c.b16 %v2362, %v2361
      %v2407 = vpack.c.b16 %v2364, %v2363
      %v2408 = vpack.c.b16 %v2366, %v2365
      %v2409 = vpack.c.b16 %v2368, %v2367
      %v2410 = vpack.c.b16 %v2370, %v2369
      %v2411 = vpack.c.b16 %v2372, %v2371
      %v2412 = vpack.c.b16 %v2374, %v2373
      %v2413 = vpack.c.b16 %v2376, %v2375
      %v2414 = vpack.c.b16 %v2378, %v2377
      %v2416 = vunpack.c.l.b16 %v2234
      %v2417 = vpack.c.b16 %v2416, %v2416
      %vm2418 = vsmask.f32 7424
      %v2420 = vshrl.u32 %v2379, 16
      %v2422 = vshll.u32 %v2379, 16
      %v2424 = vrot.slane %v2422, 1
      %v2425 = vor.u32 %v2420, %v2424
      %v2427 = vshll.u32 %v2380, 16
      %v2429 = vrot.slane %v2427, 1
      %v2430 = vsel %vm2418, %v2425, %v2429
      %v2431 = vshrl.u32 %v2380, 16
      %v2433 = vor.u32 %v2431, %v2429
      %v2435 = vshll.u32 %v2381, 16
      %v2437 = vrot.slane %v2435, 1
      %v2438 = vsel %vm2418, %v2433, %v2437
      %v2439 = vshrl.u32 %v2381, 16
      %v2441 = vor.u32 %v2439, %v2437
      %v2443 = vshll.u32 %v2382, 16
      %v2445 = vrot.slane %v2443, 1
      %v2446 = vsel %vm2418, %v2441, %v2445
      %v2447 = vshrl.u32 %v2382, 16
      %v2449 = vor.u32 %v2447, %v2445
      %v2451 = vshll.u32 %v2383, 16
      %v2453 = vrot.slane %v2451, 1
      %v2454 = vsel %vm2418, %v2449, %v2453
      %v2455 = vshrl.u32 %v2383, 16
      %v2457 = vor.u32 %v2455, %v2453
      %v2459 = vshll.u32 %v2384, 16
      %v2461 = vrot.slane %v2459, 1
      %v2462 = vsel %vm2418, %v2457, %v2461
      %v2463 = vshrl.u32 %v2384, 16
      %v2465 = vor.u32 %v2463, %v2461
      %v2467 = vshll.u32 %v2385, 16
      %v2469 = vrot.slane %v2467, 1
      %v2470 = vsel %vm2418, %v2465, %v2469
      %v2471 = vshrl.u32 %v2385, 16
      %v2473 = vor.u32 %v2471, %v2469
      %v2475 = vshll.u32 %v2386, 16
      %v2477 = vrot.slane %v2475, 1
      %v2478 = vsel %vm2418, %v2473, %v2477
      %v2479 = vshrl.u32 %v2386, 16
      %v2481 = vor.u32 %v2479, %v2477
      %v2483 = vshll.u32 %v2387, 16
      %v2485 = vrot.slane %v2483, 1
      %v2486 = vsel %vm2418, %v2481, %v2485
      %v2487 = vshrl.u32 %v2387, 16
      %v2489 = vor.u32 %v2487, %v2485
      %v2491 = vshll.u32 %v2388, 16
      %v2493 = vrot.slane %v2491, 1
      %v2494 = vsel %vm2418, %v2489, %v2493
      %v2495 = vshrl.u32 %v2388, 16
      %v2497 = vor.u32 %v2495, %v2493
      %v2499 = vshll.u32 %v2389, 16
      %v2501 = vrot.slane %v2499, 1
      %v2502 = vsel %vm2418, %v2497, %v2501
      %v2503 = vshrl.u32 %v2389, 16
      %v2505 = vor.u32 %v2503, %v2501
      %v2507 = vshll.u32 %v2390, 16
      %v2509 = vrot.slane %v2507, 1
      %v2510 = vsel %vm2418, %v2505, %v2509
      %v2511 = vshrl.u32 %v2390, 16
      %v2513 = vor.u32 %v2511, %v2509
      %v2515 = vshll.u32 %v2391, 16
      %v2517 = vrot.slane %v2515, 1
      %v2518 = vsel %vm2418, %v2513, %v2517
      %v2519 = vshrl.u32 %v2391, 16
      %v2521 = vor.u32 %v2519, %v2517
      %v2523 = vshll.u32 %v2392, 16
      %v2525 = vrot.slane %v2523, 1
      %v2526 = vsel %vm2418, %v2521, %v2525
      %v2527 = vshrl.u32 %v2392, 16
      %v2529 = vor.u32 %v2527, %v2525
      %v2531 = vshll.u32 %v2393, 16
      %v2533 = vrot.slane %v2531, 1
      %v2534 = vsel %vm2418, %v2529, %v2533
      %v2535 = vshrl.u32 %v2393, 16
      %v2537 = vor.u32 %v2535, %v2533
      %v2539 = vshll.u32 %v2394, 16
      %v2541 = vrot.slane %v2539, 1
      %v2542 = vsel %vm2418, %v2537, %v2541
      %v2543 = vshrl.u32 %v2394, 16
      %v2545 = vor.u32 %v2543, %v2541
      %v2547 = vshll.u32 %v2395, 16
      %v2549 = vrot.slane %v2547, 1
      %v2550 = vsel %vm2418, %v2545, %v2549
      %v2551 = vshrl.u32 %v2395, 16
      %v2553 = vor.u32 %v2551, %v2549
      %v2555 = vshll.u32 %v2396, 16
      %v2557 = vrot.slane %v2555, 1
      %v2558 = vsel %vm2418, %v2553, %v2557
      %v2559 = vshrl.u32 %v2396, 16
      %v2561 = vor.u32 %v2559, %v2557
      %v2563 = vshll.u32 %v2397, 16
      %v2565 = vrot.slane %v2563, 1
      %v2566 = vsel %vm2418, %v2561, %v2565
      %v2567 = vshrl.u32 %v2397, 16
      %v2569 = vor.u32 %v2567, %v2565
      %v2571 = vshll.u32 %v2398, 16
      %v2573 = vrot.slane %v2571, 1
      %v2574 = vsel %vm2418, %v2569, %v2573
      %v2575 = vshrl.u32 %v2398, 16
      %v2577 = vor.u32 %v2575, %v2573
      %v2579 = vshll.u32 %v2399, 16
      %v2581 = vrot.slane %v2579, 1
      %v2582 = vsel %vm2418, %v2577, %v2581
      %v2583 = vshrl.u32 %v2399, 16
      %v2585 = vor.u32 %v2583, %v2581
      %v2587 = vshll.u32 %v2400, 16
      %v2589 = vrot.slane %v2587, 1
      %v2590 = vsel %vm2418, %v2585, %v2589
      %v2591 = vshrl.u32 %v2400, 16
      %v2593 = vor.u32 %v2591, %v2589
      %v2595 = vshll.u32 %v2401, 16
      %v2597 = vrot.slane %v2595, 1
      %v2598 = vsel %vm2418, %v2593, %v2597
      %v2599 = vshrl.u32 %v2401, 16
      %v2601 = vor.u32 %v2599, %v2597
      %v2603 = vshll.u32 %v2402, 16
      %v2605 = vrot.slane %v2603, 1
      %v2606 = vsel %vm2418, %v2601, %v2605
      %v2607 = vshrl.u32 %v2402, 16
      %v2609 = vor.u32 %v2607, %v2605
      %v2611 = vshll.u32 %v2403, 16
      %v2613 = vrot.slane %v2611, 1
      %v2614 = vsel %vm2418, %v2609, %v2613
      %v2615 = vshrl.u32 %v2403, 16
      %v2617 = vor.u32 %v2615, %v2613
      %v2619 = vshll.u32 %v2404, 16
      %v2621 = vrot.slane %v2619, 1
      %v2622 = vsel %vm2418, %v2617, %v2621
      %v2623 = vshrl.u32 %v2404, 16
      %v2625 = vor.u32 %v2623, %v2621
      %v2627 = vshll.u32 %v2405, 16
      %v2629 = vrot.slane %v2627, 1
      %v2630 = vsel %vm2418, %v2625, %v2629
      %v2631 = vshrl.u32 %v2405, 16
      %v2633 = vor.u32 %v2631, %v2629
      %v2635 = vshll.u32 %v2406, 16
      %v2637 = vrot.slane %v2635, 1
      %v2638 = vsel %vm2418, %v2633, %v2637
      %v2639 = vshrl.u32 %v2406, 16
      %v2641 = vor.u32 %v2639, %v2637
      %v2643 = vshll.u32 %v2407, 16
      %v2645 = vrot.slane %v2643, 1
      %v2646 = vsel %vm2418, %v2641, %v2645
      %v2647 = vshrl.u32 %v2407, 16
      %v2649 = vor.u32 %v2647, %v2645
      %v2651 = vshll.u32 %v2408, 16
      %v2653 = vrot.slane %v2651, 1
      %v2654 = vsel %vm2418, %v2649, %v2653
      %v2655 = vshrl.u32 %v2408, 16
      %v2657 = vor.u32 %v2655, %v2653
      %v2659 = vshll.u32 %v2409, 16
      %v2661 = vrot.slane %v2659, 1
      %v2662 = vsel %vm2418, %v2657, %v2661
      %v2663 = vshrl.u32 %v2409, 16
      %v2665 = vor.u32 %v2663, %v2661
      %v2667 = vshll.u32 %v2410, 16
      %v2669 = vrot.slane %v2667, 1
      %v2670 = vsel %vm2418, %v2665, %v2669
      %v2671 = vshrl.u32 %v2410, 16
      %v2673 = vor.u32 %v2671, %v2669
      %v2675 = vshll.u32 %v2411, 16
      %v2677 = vrot.slane %v2675, 1
      %v2678 = vsel %vm2418, %v2673, %v2677
      %v2679 = vshrl.u32 %v2411, 16
      %v2681 = vor.u32 %v2679, %v2677
      %v2683 = vshll.u32 %v2412, 16
      %v2685 = vrot.slane %v2683, 1
      %v2686 = vsel %vm2418, %v2681, %v2685
      %v2687 = vshrl.u32 %v2412, 16
      %v2689 = vor.u32 %v2687, %v2685
      %v2691 = vshll.u32 %v2413, 16
      %v2693 = vrot.slane %v2691, 1
      %v2694 = vsel %vm2418, %v2689, %v2693
      %v2695 = vshrl.u32 %v2413, 16
      %v2697 = vor.u32 %v2695, %v2693
      %v2699 = vshll.u32 %v2414, 16
      %v2701 = vrot.slane %v2699, 1
      %v2702 = vsel %vm2418, %v2697, %v2701
      %v2703 = vshrl.u32 %v2414, 16
      %v2705 = vor.u32 %v2703, %v2701
      %v2707 = vshll.u32 %v2417, 16
      %v2709 = vrot.slane %v2707, 1
      %v2710 = vsel %vm2418, %v2705, %v2709
      %2711 = vrot.lane.b32.xlu0 %v2430, 4
      %v2712 = vpop.permute.xlu0 %2711
      %2713 = vrot.lane.b32.xlu0 %v2438, 4
      %v2714 = vpop.permute.xlu0 %2713
      %2715 = vrot.lane.b32.xlu0 %v2446, 4
      %v2716 = vpop.permute.xlu0 %2715
      %2717 = vrot.lane.b32.xlu0 %v2454, 4
      %v2718 = vpop.permute.xlu0 %2717
      %2719 = vrot.lane.b32.xlu0 %v2462, 4
      %v2720 = vpop.permute.xlu0 %2719
      %2721 = vrot.lane.b32.xlu0 %v2470, 4
      %v2722 = vpop.permute.xlu0 %2721
      %2723 = vrot.lane.b32.xlu0 %v2478, 4
      %v2724 = vpop.permute.xlu0 %2723
      %2725 = vrot.lane.b32.xlu0 %v2486, 4
      %v2726 = vpop.permute.xlu0 %2725
      %2727 = vrot.lane.b32.xlu0 %v2494, 4
      %v2728 = vpop.permute.xlu0 %2727
      %2729 = vrot.lane.b32.xlu0 %v2502, 4
      %v2730 = vpop.permute.xlu0 %2729
      %2731 = vrot.lane.b32.xlu0 %v2510, 4
      %v2732 = vpop.permute.xlu0 %2731
      %2733 = vrot.lane.b32.xlu0 %v2518, 4
      %v2734 = vpop.permute.xlu0 %2733
      %2735 = vrot.lane.b32.xlu0 %v2526, 4
      %v2736 = vpop.permute.xlu0 %2735
      %2737 = vrot.lane.b32.xlu0 %v2534, 4
      %v2738 = vpop.permute.xlu0 %2737
      %2739 = vrot.lane.b32.xlu0 %v2542, 4
      %v2740 = vpop.permute.xlu0 %2739
      %2741 = vrot.lane.b32.xlu0 %v2550, 4
      %v2742 = vpop.permute.xlu0 %2741
      %2743 = vrot.lane.b32.xlu0 %v2558, 4
      %v2744 = vpop.permute.xlu0 %2743
      %2745 = vrot.lane.b32.xlu0 %v2566, 4
      %v2746 = vpop.permute.xlu0 %2745
      %2747 = vrot.lane.b32.xlu0 %v2574, 4
      %v2748 = vpop.permute.xlu0 %2747
      %2749 = vrot.lane.b32.xlu0 %v2582, 4
      %v2750 = vpop.permute.xlu0 %2749
      %2751 = vrot.lane.b32.xlu0 %v2590, 4
      %v2752 = vpop.permute.xlu0 %2751
      %2753 = vrot.lane.b32.xlu0 %v2598, 4
      %v2754 = vpop.permute.xlu0 %2753
      %2755 = vrot.lane.b32.xlu0 %v2606, 4
      %v2756 = vpop.permute.xlu0 %2755
      %2757 = vrot.lane.b32.xlu0 %v2614, 4
      %v2758 = vpop.permute.xlu0 %2757
      %2759 = vrot.lane.b32.xlu0 %v2622, 4
      %v2760 = vpop.permute.xlu0 %2759
      %2761 = vrot.lane.b32.xlu0 %v2630, 4
      %v2762 = vpop.permute.xlu0 %2761
      %2763 = vrot.lane.b32.xlu0 %v2638, 4
      %v2764 = vpop.permute.xlu0 %2763
      %2765 = vrot.lane.b32.xlu0 %v2646, 4
      %v2766 = vpop.permute.xlu0 %2765
      %2767 = vrot.lane.b32.xlu0 %v2654, 4
      %v2768 = vpop.permute.xlu0 %2767
      %2769 = vrot.lane.b32.xlu0 %v2662, 4
      %v2770 = vpop.permute.xlu0 %2769
      %2771 = vrot.lane.b32.xlu0 %v2670, 4
      %v2772 = vpop.permute.xlu0 %2771
      %2773 = vrot.lane.b32.xlu0 %v2678, 4
      %v2774 = vpop.permute.xlu0 %2773
      %2775 = vrot.lane.b32.xlu0 %v2686, 4
      %v2776 = vpop.permute.xlu0 %2775
      %2777 = vrot.lane.b32.xlu0 %v2694, 4
      %v2778 = vpop.permute.xlu0 %2777
      %2779 = vrot.lane.b32.xlu0 %v2702, 4
      %v2780 = vpop.permute.xlu0 %2779
      %2781 = vrot.lane.b32.xlu0 %v2710, 4
      %v2782 = vpop.permute.xlu0 %2781
      %vm2783 = vcmask 1046528
      %v2784 = vrot.slane %v2379, 1
      %v2785 = vrot.slane %v2380, 1
      %v2786 = vsel %vm2783, %v2784, %v2785
      %v2787 = vrot.slane %v2381, 1
      %v2788 = vsel %vm2783, %v2785, %v2787
      %v2789 = vrot.slane %v2382, 1
      %v2790 = vsel %vm2783, %v2787, %v2789
      %v2791 = vrot.slane %v2383, 1
      %v2792 = vsel %vm2783, %v2789, %v2791
      %v2793 = vrot.slane %v2384, 1
      %v2794 = vsel %vm2783, %v2791, %v2793
      %v2795 = vrot.slane %v2385, 1
      %v2796 = vsel %vm2783, %v2793, %v2795
      %v2797 = vrot.slane %v2386, 1
      %v2798 = vsel %vm2783, %v2795, %v2797
      %v2799 = vrot.slane %v2387, 1
      %v2800 = vsel %vm2783, %v2797, %v2799
      %v2801 = vrot.slane %v2388, 1
      %v2802 = vsel %vm2783, %v2799, %v2801
      %v2803 = vrot.slane %v2389, 1
      %v2804 = vsel %vm2783, %v2801, %v2803
      %v2805 = vrot.slane %v2390, 1
      %v2806 = vsel %vm2783, %v2803, %v2805
      %v2807 = vrot.slane %v2391, 1
      %v2808 = vsel %vm2783, %v2805, %v2807
      %v2809 = vrot.slane %v2392, 1
      %v2810 = vsel %vm2783, %v2807, %v2809
      %v2811 = vrot.slane %v2393, 1
      %v2812 = vsel %vm2783, %v2809, %v2811
      %v2813 = vrot.slane %v2394, 1
      %v2814 = vsel %vm2783, %v2811, %v2813
      %v2815 = vrot.slane %v2395, 1
      %v2816 = vsel %vm2783, %v2813, %v2815
      %v2817 = vrot.slane %v2396, 1
      %v2818 = vsel %vm2783, %v2815, %v2817
      %v2819 = vrot.slane %v2397, 1
      %v2820 = vsel %vm2783, %v2817, %v2819
      %v2821 = vrot.slane %v2398, 1
      %v2822 = vsel %vm2783, %v2819, %v2821
      %v2823 = vrot.slane %v2399, 1
      %v2824 = vsel %vm2783, %v2821, %v2823
      %v2825 = vrot.slane %v2400, 1
      %v2826 = vsel %vm2783, %v2823, %v2825
      %v2827 = vrot.slane %v2401, 1
      %v2828 = vsel %vm2783, %v2825, %v2827
      %v2829 = vrot.slane %v2402, 1
      %v2830 = vsel %vm2783, %v2827, %v2829
      %v2831 = vrot.slane %v2403, 1
      %v2832 = vsel %vm2783, %v2829, %v2831
      %v2833 = vrot.slane %v2404, 1
      %v2834 = vsel %vm2783, %v2831, %v2833
      %v2835 = vrot.slane %v2405, 1
      %v2836 = vsel %vm2783, %v2833, %v2835
      %v2837 = vrot.slane %v2406, 1
      %v2838 = vsel %vm2783, %v2835, %v2837
      %v2839 = vrot.slane %v2407, 1
      %v2840 = vsel %vm2783, %v2837, %v2839
      %v2841 = vrot.slane %v2408, 1
      %v2842 = vsel %vm2783, %v2839, %v2841
      %v2843 = vrot.slane %v2409, 1
      %v2844 = vsel %vm2783, %v2841, %v2843
      %v2845 = vrot.slane %v2410, 1
      %v2846 = vsel %vm2783, %v2843, %v2845
      %v2847 = vrot.slane %v2411, 1
      %v2848 = vsel %vm2783, %v2845, %v2847
      %v2849 = vrot.slane %v2412, 1
      %v2850 = vsel %vm2783, %v2847, %v2849
      %v2851 = vrot.slane %v2413, 1
      %v2852 = vsel %vm2783, %v2849, %v2851
      %v2853 = vrot.slane %v2414, 1
      %v2854 = vsel %vm2783, %v2851, %v2853
      %v2855 = vrot.slane %v2417, 1
      %v2856 = vsel %vm2783, %v2853, %v2855
      %2857 = vrot.lane.b32.xlu0 %v2786, 8
      %v2858 = vpop.permute.xlu0 %2857
      %2859 = vrot.lane.b32.xlu0 %v2788, 8
      %v2860 = vpop.permute.xlu0 %2859
      %2861 = vrot.lane.b32.xlu0 %v2790, 8
      %v2862 = vpop.permute.xlu0 %2861
      %2863 = vrot.lane.b32.xlu0 %v2792, 8
      %v2864 = vpop.permute.xlu0 %2863
      %2865 = vrot.lane.b32.xlu0 %v2794, 8
      %v2866 = vpop.permute.xlu0 %2865
      %2867 = vrot.lane.b32.xlu0 %v2796, 8
      %v2868 = vpop.permute.xlu0 %2867
      %2869 = vrot.lane.b32.xlu0 %v2798, 8
      %v2870 = vpop.permute.xlu0 %2869
      %2871 = vrot.lane.b32.xlu0 %v2800, 8
      %v2872 = vpop.permute.xlu0 %2871
      %2873 = vrot.lane.b32.xlu0 %v2802, 8
      %v2874 = vpop.permute.xlu0 %2873
      %2875 = vrot.lane.b32.xlu0 %v2804, 8
      %v2876 = vpop.permute.xlu0 %2875
      %2877 = vrot.lane.b32.xlu0 %v2806, 8
      %v2878 = vpop.permute.xlu0 %2877
      %2879 = vrot.lane.b32.xlu0 %v2808, 8
      %v2880 = vpop.permute.xlu0 %2879
      %2881 = vrot.lane.b32.xlu0 %v2810, 8
      %v2882 = vpop.permute.xlu0 %2881
      %2883 = vrot.lane.b32.xlu0 %v2812, 8
      %v2884 = vpop.permute.xlu0 %2883
      %2885 = vrot.lane.b32.xlu0 %v2814, 8
      %v2886 = vpop.permute.xlu0 %2885
      %2887 = vrot.lane.b32.xlu0 %v2816, 8
      %v2888 = vpop.permute.xlu0 %2887
      %2889 = vrot.lane.b32.xlu0 %v2818, 8
      %v2890 = vpop.permute.xlu0 %2889
      %2891 = vrot.lane.b32.xlu0 %v2820, 8
      %v2892 = vpop.permute.xlu0 %2891
      %2893 = vrot.lane.b32.xlu0 %v2822, 8
      %v2894 = vpop.permute.xlu0 %2893
      %2895 = vrot.lane.b32.xlu0 %v2824, 8
      %v2896 = vpop.permute.xlu0 %2895
      %2897 = vrot.lane.b32.xlu0 %v2826, 8
      %v2898 = vpop.permute.xlu0 %2897
      %2899 = vrot.lane.b32.xlu0 %v2828, 8
      %v2900 = vpop.permute.xlu0 %2899
      %2901 = vrot.lane.b32.xlu0 %v2830, 8
      %v2902 = vpop.permute.xlu0 %2901
      %2903 = vrot.lane.b32.xlu0 %v2832, 8
      %v2904 = vpop.permute.xlu0 %2903
      %2905 = vrot.lane.b32.xlu0 %v2834, 8
      %v2906 = vpop.permute.xlu0 %2905
      %2907 = vrot.lane.b32.xlu0 %v2836, 8
      %v2908 = vpop.permute.xlu0 %2907
      %2909 = vrot.lane.b32.xlu0 %v2838, 8
      %v2910 = vpop.permute.xlu0 %2909
      %2911 = vrot.lane.b32.xlu0 %v2840, 8
      %v2912 = vpop.permute.xlu0 %2911
      %2913 = vrot.lane.b32.xlu0 %v2842, 8
      %v2914 = vpop.permute.xlu0 %2913
      %2915 = vrot.lane.b32.xlu0 %v2844, 8
      %v2916 = vpop.permute.xlu0 %2915
      %2917 = vrot.lane.b32.xlu0 %v2846, 8
      %v2918 = vpop.permute.xlu0 %2917
      %2919 = vrot.lane.b32.xlu0 %v2848, 8
      %v2920 = vpop.permute.xlu0 %2919
      %2921 = vrot.lane.b32.xlu0 %v2850, 8
      %v2922 = vpop.permute.xlu0 %2921
      %2923 = vrot.lane.b32.xlu0 %v2852, 8
      %v2924 = vpop.permute.xlu0 %2923
      %2925 = vrot.lane.b32.xlu0 %v2854, 8
      %v2926 = vpop.permute.xlu0 %2925
      %2927 = vrot.lane.b32.xlu0 %v2856, 8
      %v2928 = vpop.permute.xlu0 %2927
      %vm2929 = vcmask 31744
      %v2931 = vsel %vm2929, %v2379, %v2712
      %v2933 = vsel %vm2929, %v2380, %v2714
      %v2935 = vsel %vm2929, %v2381, %v2716
      %v2937 = vsel %vm2929, %v2382, %v2718
      %v2939 = vsel %vm2929, %v2383, %v2720
      %v2941 = vsel %vm2929, %v2384, %v2722
      %v2943 = vsel %vm2929, %v2385, %v2724
      %v2945 = vsel %vm2929, %v2386, %v2726
      %v2947 = vsel %vm2929, %v2387, %v2728
      %v2949 = vsel %vm2929, %v2388, %v2730
      %v2951 = vsel %vm2929, %v2389, %v2732
      %v2953 = vsel %vm2929, %v2390, %v2734
      %v2955 = vsel %vm2929, %v2391, %v2736
      %v2957 = vsel %vm2929, %v2392, %v2738
      %v2959 = vsel %vm2929, %v2393, %v2740
      %v2961 = vsel %vm2929, %v2394, %v2742
      %v2963 = vsel %vm2929, %v2395, %v2744
      %v2965 = vsel %vm2929, %v2396, %v2746
      %v2967 = vsel %vm2929, %v2397, %v2748
      %v2969 = vsel %vm2929, %v2398, %v2750
      %v2971 = vsel %vm2929, %v2399, %v2752
      %v2973 = vsel %vm2929, %v2400, %v2754
      %v2975 = vsel %vm2929, %v2401, %v2756
      %v2977 = vsel %vm2929, %v2402, %v2758
      %v2979 = vsel %vm2929, %v2403, %v2760
      %v2981 = vsel %vm2929, %v2404, %v2762
      %v2983 = vsel %vm2929, %v2405, %v2764
      %v2985 = vsel %vm2929, %v2406, %v2766
      %v2987 = vsel %vm2929, %v2407, %v2768
      %v2989 = vsel %vm2929, %v2408, %v2770
      %v2991 = vsel %vm2929, %v2409, %v2772
      %v2993 = vsel %vm2929, %v2410, %v2774
      %v2995 = vsel %vm2929, %v2411, %v2776
      %v2997 = vsel %vm2929, %v2412, %v2778
      %v2999 = vsel %vm2929, %v2413, %v2780
      %v3001 = vsel %vm2929, %v2414, %v2782
      %vm3002 = vcmask 64512
      %v3004 = vsel %vm3002, %v2931, %v2858
      %v3006 = vsel %vm3002, %v2933, %v2860
      %v3008 = vsel %vm3002, %v2935, %v2862
      %v3010 = vsel %vm3002, %v2937, %v2864
      %v3012 = vsel %vm3002, %v2939, %v2866
      %v3014 = vsel %vm3002, %v2941, %v2868
      %v3016 = vsel %vm3002, %v2943, %v2870
      %v3018 = vsel %vm3002, %v2945, %v2872
      %v3020 = vsel %vm3002, %v2947, %v2874
      %v3022 = vsel %vm3002, %v2949, %v2876
      %v3024 = vsel %vm3002, %v2951, %v2878
      %v3026 = vsel %vm3002, %v2953, %v2880
      %v3028 = vsel %vm3002, %v2955, %v2882
      %v3030 = vsel %vm3002, %v2957, %v2884
      %v3032 = vsel %vm3002, %v2959, %v2886
      %v3034 = vsel %vm3002, %v2961, %v2888
      %v3036 = vsel %vm3002, %v2963, %v2890
      %v3038 = vsel %vm3002, %v2965, %v2892
      %v3040 = vsel %vm3002, %v2967, %v2894
      %v3042 = vsel %vm3002, %v2969, %v2896
      %v3044 = vsel %vm3002, %v2971, %v2898
      %v3046 = vsel %vm3002, %v2973, %v2900
      %v3048 = vsel %vm3002, %v2975, %v2902
      %v3050 = vsel %vm3002, %v2977, %v2904
      %v3052 = vsel %vm3002, %v2979, %v2906
      %v3054 = vsel %vm3002, %v2981, %v2908
      %v3056 = vsel %vm3002, %v2983, %v2910
      %v3058 = vsel %vm3002, %v2985, %v2912
      %v3060 = vsel %vm3002, %v2987, %v2914
      %v3062 = vsel %vm3002, %v2989, %v2916
      %v3064 = vsel %vm3002, %v2991, %v2918
      %v3066 = vsel %vm3002, %v2993, %v2920
      %v3068 = vsel %vm3002, %v2995, %v2922
      %v3070 = vsel %vm3002, %v2997, %v2924
      %v3072 = vsel %vm3002, %v2999, %v2926
      %v3074 = vsel %vm3002, %v3001, %v2928
      %3107 = vrot.lane.b32.xlu0 %v3008, 12
      %v3108 = vpop.permute.xlu0 %3107
      %3109 = vrot.lane.b32.xlu0 %v3010, 12
      %v3110 = vpop.permute.xlu0 %3109
      %3111 = vrot.lane.b32.xlu0 %v3012, 12
      %v3112 = vpop.permute.xlu0 %3111
      %3113 = vrot.lane.b32.xlu0 %v3014, 12
      %v3114 = vpop.permute.xlu0 %3113
      %3115 = vrot.lane.b32.xlu0 %v3016, 12
      %v3116 = vpop.permute.xlu0 %3115
      %3117 = vrot.lane.b32.xlu0 %v3018, 12
      %v3118 = vpop.permute.xlu0 %3117
      %3119 = vrot.lane.b32.xlu0 %v3020, 12
      %v3120 = vpop.permute.xlu0 %3119
      %3121 = vrot.lane.b32.xlu0 %v3022, 12
      %v3122 = vpop.permute.xlu0 %3121
      %3123 = vrot.lane.b32.xlu0 %v3024, 12
      %v3124 = vpop.permute.xlu0 %3123
      %3125 = vrot.lane.b32.xlu0 %v3026, 12
      %v3126 = vpop.permute.xlu0 %3125
      %3127 = vrot.lane.b32.xlu0 %v3028, 12
      %v3128 = vpop.permute.xlu0 %3127
      %3129 = vrot.lane.b32.xlu0 %v3030, 12
      %v3130 = vpop.permute.xlu0 %3129
      %3131 = vrot.lane.b32.xlu0 %v3032, 12
      %v3132 = vpop.permute.xlu0 %3131
      %3133 = vrot.lane.b32.xlu0 %v3034, 12
      %v3134 = vpop.permute.xlu0 %3133
      %3135 = vrot.lane.b32.xlu0 %v3036, 12
      %v3136 = vpop.permute.xlu0 %3135
      %3137 = vrot.lane.b32.xlu0 %v3038, 12
      %v3138 = vpop.permute.xlu0 %3137
      %3139 = vrot.lane.b32.xlu0 %v3040, 12
      %v3140 = vpop.permute.xlu0 %3139
      %3141 = vrot.lane.b32.xlu0 %v3042, 12
      %v3142 = vpop.permute.xlu0 %3141
      %3143 = vrot.lane.b32.xlu0 %v3044, 12
      %v3144 = vpop.permute.xlu0 %3143
      %3145 = vrot.lane.b32.xlu0 %v3046, 12
      %v3146 = vpop.permute.xlu0 %3145
      %3147 = vrot.lane.b32.xlu0 %v3048, 12
      %v3148 = vpop.permute.xlu0 %3147
      %3149 = vrot.lane.b32.xlu0 %v3050, 12
      %v3150 = vpop.permute.xlu0 %3149
      %3151 = vrot.lane.b32.xlu0 %v3052, 12
      %v3152 = vpop.permute.xlu0 %3151
      %3153 = vrot.lane.b32.xlu0 %v3054, 12
      %v3154 = vpop.permute.xlu0 %3153
      %3155 = vrot.lane.b32.xlu0 %v3056, 12
      %v3156 = vpop.permute.xlu0 %3155
      %3157 = vrot.lane.b32.xlu0 %v3058, 12
      %v3158 = vpop.permute.xlu0 %3157
      %3159 = vrot.lane.b32.xlu0 %v3060, 12
      %v3160 = vpop.permute.xlu0 %3159
      %3161 = vrot.lane.b32.xlu0 %v3062, 12
      %v3162 = vpop.permute.xlu0 %3161
      %3163 = vrot.lane.b32.xlu0 %v3064, 12
      %v3164 = vpop.permute.xlu0 %3163
      %3165 = vrot.lane.b32.xlu0 %v3066, 12
      %v3166 = vpop.permute.xlu0 %3165
      %3167 = vrot.lane.b32.xlu0 %v3068, 12
      %v3168 = vpop.permute.xlu0 %3167
      %3169 = vrot.lane.b32.xlu0 %v3070, 12
      %v3170 = vpop.permute.xlu0 %3169
      %3173 = vrot.lane.b32.xlu0 %v3012, 24
      %v3174 = vpop.permute.xlu0 %3173
      %3175 = vrot.lane.b32.xlu0 %v3014, 24
      %v3176 = vpop.permute.xlu0 %3175
      %3177 = vrot.lane.b32.xlu0 %v3016, 24
      %v3178 = vpop.permute.xlu0 %3177
      %3179 = vrot.lane.b32.xlu0 %v3018, 24
      %v3180 = vpop.permute.xlu0 %3179
      %3181 = vrot.lane.b32.xlu0 %v3020, 24
      %v3182 = vpop.permute.xlu0 %3181
      %3183 = vrot.lane.b32.xlu0 %v3022, 24
      %v3184 = vpop.permute.xlu0 %3183
      %3185 = vrot.lane.b32.xlu0 %v3024, 24
      %v3186 = vpop.permute.xlu0 %3185
      %3187 = vrot.lane.b32.xlu0 %v3026, 24
      %v3188 = vpop.permute.xlu0 %3187
      %3189 = vrot.lane.b32.xlu0 %v3028, 24
      %v3190 = vpop.permute.xlu0 %3189
      %3191 = vrot.lane.b32.xlu0 %v3030, 24
      %v3192 = vpop.permute.xlu0 %3191
      %3193 = vrot.lane.b32.xlu0 %v3032, 24
      %v3194 = vpop.permute.xlu0 %3193
      %3195 = vrot.lane.b32.xlu0 %v3034, 24
      %v3196 = vpop.permute.xlu0 %3195
      %3197 = vrot.lane.b32.xlu0 %v3036, 24
      %v3198 = vpop.permute.xlu0 %3197
      %3199 = vrot.lane.b32.xlu0 %v3038, 24
      %v3200 = vpop.permute.xlu0 %3199
      %3201 = vrot.lane.b32.xlu0 %v3040, 24
      %v3202 = vpop.permute.xlu0 %3201
      %3203 = vrot.lane.b32.xlu0 %v3042, 24
      %v3204 = vpop.permute.xlu0 %3203
      %3205 = vrot.lane.b32.xlu0 %v3044, 24
      %v3206 = vpop.permute.xlu0 %3205
      %3207 = vrot.lane.b32.xlu0 %v3046, 24
      %v3208 = vpop.permute.xlu0 %3207
      %3209 = vrot.lane.b32.xlu0 %v3048, 24
      %v3210 = vpop.permute.xlu0 %3209
      %3211 = vrot.lane.b32.xlu0 %v3050, 24
      %v3212 = vpop.permute.xlu0 %3211
      %3213 = vrot.lane.b32.xlu0 %v3052, 24
      %v3214 = vpop.permute.xlu0 %3213
      %3215 = vrot.lane.b32.xlu0 %v3054, 24
      %v3216 = vpop.permute.xlu0 %3215
      %3217 = vrot.lane.b32.xlu0 %v3056, 24
      %v3218 = vpop.permute.xlu0 %3217
      %3219 = vrot.lane.b32.xlu0 %v3058, 24
      %v3220 = vpop.permute.xlu0 %3219
      %3221 = vrot.lane.b32.xlu0 %v3060, 24
      %v3222 = vpop.permute.xlu0 %3221
      %3223 = vrot.lane.b32.xlu0 %v3062, 24
      %v3224 = vpop.permute.xlu0 %3223
      %3225 = vrot.lane.b32.xlu0 %v3064, 24
      %v3226 = vpop.permute.xlu0 %3225
      %3227 = vrot.lane.b32.xlu0 %v3066, 24
      %v3228 = vpop.permute.xlu0 %3227
      %3229 = vrot.lane.b32.xlu0 %v3068, 24
      %v3230 = vpop.permute.xlu0 %3229
      %3231 = vrot.lane.b32.xlu0 %v3070, 24
      %v3232 = vpop.permute.xlu0 %3231
      %3233 = vrot.lane.b32.xlu0 %v3072, 24
      %v3234 = vpop.permute.xlu0 %3233
      %3235 = vrot.lane.b32.xlu0 %v3074, 24
      %v3236 = vpop.permute.xlu0 %3235
      %v3238 = vsel %vm719, %v3004, %v3108
      %v3240 = vsel %vm719, %v3006, %v3110
      %v3242 = vsel %vm719, %v3008, %v3112
      %v3244 = vsel %vm719, %v3010, %v3114
      %v3246 = vsel %vm719, %v3012, %v3116
      %v3248 = vsel %vm719, %v3014, %v3118
      %v3250 = vsel %vm719, %v3016, %v3120
      %v3252 = vsel %vm719, %v3018, %v3122
      %v3254 = vsel %vm719, %v3020, %v3124
      %v3256 = vsel %vm719, %v3022, %v3126
      %v3258 = vsel %vm719, %v3024, %v3128
      %v3260 = vsel %vm719, %v3026, %v3130
      %v3262 = vsel %vm719, %v3028, %v3132
      %v3264 = vsel %vm719, %v3030, %v3134
      %v3266 = vsel %vm719, %v3032, %v3136
      %v3268 = vsel %vm719, %v3034, %v3138
      %v3270 = vsel %vm719, %v3036, %v3140
      %v3272 = vsel %vm719, %v3038, %v3142
      %v3274 = vsel %vm719, %v3040, %v3144
      %v3276 = vsel %vm719, %v3042, %v3146
      %v3278 = vsel %vm719, %v3044, %v3148
      %v3280 = vsel %vm719, %v3046, %v3150
      %v3282 = vsel %vm719, %v3048, %v3152
      %v3284 = vsel %vm719, %v3050, %v3154
      %v3286 = vsel %vm719, %v3052, %v3156
      %v3288 = vsel %vm719, %v3054, %v3158
      %v3290 = vsel %vm719, %v3056, %v3160
      %v3292 = vsel %vm719, %v3058, %v3162
      %v3294 = vsel %vm719, %v3060, %v3164
      %v3296 = vsel %vm719, %v3062, %v3166
      %v3298 = vsel %vm719, %v3064, %v3168
      %v3300 = vsel %vm719, %v3066, %v3170
      %v3302 = vsel %vm834, %v3238, %v3174
      %v3304 = vsel %vm834, %v3240, %v3176
      %v3306 = vsel %vm834, %v3242, %v3178
      %v3308 = vsel %vm834, %v3244, %v3180
      %v3310 = vsel %vm834, %v3246, %v3182
      %v3312 = vsel %vm834, %v3248, %v3184
      %v3314 = vsel %vm834, %v3250, %v3186
      %v3316 = vsel %vm834, %v3252, %v3188
      %v3318 = vsel %vm834, %v3254, %v3190
      %v3320 = vsel %vm834, %v3256, %v3192
      %v3322 = vsel %vm834, %v3258, %v3194
      %v3324 = vsel %vm834, %v3260, %v3196
      %v3326 = vsel %vm834, %v3262, %v3198
      %v3328 = vsel %vm834, %v3264, %v3200
      %v3330 = vsel %vm834, %v3266, %v3202
      %v3332 = vsel %vm834, %v3268, %v3204
      %v3334 = vsel %vm834, %v3270, %v3206
      %v3336 = vsel %vm834, %v3272, %v3208
      %v3338 = vsel %vm834, %v3274, %v3210
      %v3340 = vsel %vm834, %v3276, %v3212
      %v3342 = vsel %vm834, %v3278, %v3214
      %v3344 = vsel %vm834, %v3280, %v3216
      %v3346 = vsel %vm834, %v3282, %v3218
      %v3348 = vsel %vm834, %v3284, %v3220
      %v3350 = vsel %vm834, %v3286, %v3222
      %v3352 = vsel %vm834, %v3288, %v3224
      %v3354 = vsel %vm834, %v3290, %v3226
      %v3356 = vsel %vm834, %v3292, %v3228
      %v3358 = vsel %vm834, %v3294, %v3230
      %v3360 = vsel %vm834, %v3296, %v3232
      %v3362 = vsel %vm834, %v3298, %v3234
      %v3364 = vsel %vm834, %v3300, %v3236
      %v3365 = vld [vmem:[%s4] sm:$0x3]
      %v3366 = vld [vmem:[%s5] sm:$0xf]
      %3368 = vset.pattern.permute.xlu0 0
      %3369 = vperm.xlu0 %3368, %v3366
      %v3370 = vpop.permute.xlu0 %3369
      %v3373 = vsel %vm935, %v3365, 0
      %v3375 = vsel %vm935, %v3302, 0
      %v3377 = vsel %vm935, %v3304, 0
      %v3379 = vsel %vm935, %v3306, 0
      %v3381 = vsel %vm935, %v3308, 0
      %v3383 = vsel %vm935, %v3310, 0
      %v3385 = vsel %vm935, %v3312, 0
      %v3387 = vsel %vm935, %v3314, 0
      %v3389 = vsel %vm935, %v3316, 0
      %v3391 = vsel %vm935, %v3318, 0
      %v3393 = vsel %vm935, %v3320, 0
      %v3395 = vsel %vm935, %v3322, 0
      %v3397 = vsel %vm935, %v3324, 0
      %v3399 = vsel %vm935, %v3326, 0
      %v3401 = vsel %vm935, %v3328, 0
      %v3403 = vsel %vm935, %v3330, 0
      %v3405 = vsel %vm935, %v3332, 0
      %v3407 = vsel %vm935, %v3334, 0
      %v3409 = vsel %vm935, %v3336, 0
      %v3411 = vsel %vm935, %v3338, 0
      %v3413 = vsel %vm935, %v3340, 0
      %v3415 = vsel %vm935, %v3342, 0
      %v3417 = vsel %vm935, %v3344, 0
      %v3419 = vsel %vm935, %v3346, 0
      %v3421 = vsel %vm935, %v3348, 0
      %v3423 = vsel %vm935, %v3350, 0
      %v3425 = vsel %vm935, %v3352, 0
      %v3427 = vsel %vm935, %v3354, 0
      %v3429 = vsel %vm935, %v3356, 0
      %v3431 = vsel %vm935, %v3358, 0
      %v3433 = vsel %vm935, %v3360, 0
      %v3435 = vsel %vm935, %v3362, 0
      %v3437 = vsel %vm935, %v3364, 0
      %3439 = vmatpush.bf16.xpose.msra.mxu0 %v3389
      %3440 = vmatpush.bf16.xpose.msra.mxu0 %v3387
      %3441 = vmatpush.bf16.xpose.msra.mxu0 %v3385
      %3442 = vmatpush.bf16.xpose.msra.mxu0 %v3383
      %3443 = vmatpush.bf16.xpose.msra.mxu0 %v3381
      %3444 = vmatpush.bf16.xpose.msra.mxu0 %v3379
      %3445 = vmatpush.bf16.xpose.msra.mxu0 %v3377
      %3446 = vmatpush.bf16.xpose.msra.mxu0 %v3375
      %3447 = vmatmul.bf16.gmra.mxu0 %v3373
      %v3448 = vpop.f32.mrf.mxu0
      %v3449 = vadd.f32 %v3370, %v3448
      %v3450 = vpop.f32.mrf.mxu0
      %3451 = vdwg.mxu0
      %3452 = vmatpush.bf16.xpose.msra.mxu0 %v3405
      %3453 = vmatpush.bf16.xpose.msra.mxu0 %v3403
      %3454 = vmatpush.bf16.xpose.msra.mxu0 %v3401
      %3455 = vmatpush.bf16.xpose.msra.mxu0 %v3399
      %3456 = vmatpush.bf16.xpose.msra.mxu0 %v3397
      %3457 = vmatpush.bf16.xpose.msra.mxu0 %v3395
      %3458 = vmatpush.bf16.xpose.msra.mxu0 %v3393
      %3459 = vmatpush.bf16.xpose.msra.mxu0 %v3391
      %3460 = vmatmul.bf16.gmra.mxu0 %v3373
      %v3461 = vpop.f32.mrf.mxu0
      %v3462 = vadd.f32 %v3370, %v3461
      %v3463 = vpop.f32.mrf.mxu0
      %3464 = vdwg.mxu0
      %3465 = vmatpush.bf16.xpose.msra.mxu0 %v3421
      %3466 = vmatpush.bf16.xpose.msra.mxu0 %v3419
      %3467 = vmatpush.bf16.xpose.msra.mxu0 %v3417
      %3468 = vmatpush.bf16.xpose.msra.mxu0 %v3415
      %3469 = vmatpush.bf16.xpose.msra.mxu0 %v3413
      %3470 = vmatpush.bf16.xpose.msra.mxu0 %v3411
      %3471 = vmatpush.bf16.xpose.msra.mxu0 %v3409
      %3472 = vmatpush.bf16.xpose.msra.mxu0 %v3407
      %3473 = vmatmul.bf16.gmra.mxu0 %v3373
      %v3474 = vpop.f32.mrf.mxu0
      %v3475 = vadd.f32 %v3370, %v3474
      %v3476 = vpop.f32.mrf.mxu0
      %3477 = vdwg.mxu0
      %3478 = vmatpush.bf16.xpose.msra.mxu0 %v3437
      %3479 = vmatpush.bf16.xpose.msra.mxu0 %v3435
      %3480 = vmatpush.bf16.xpose.msra.mxu0 %v3433
      %3481 = vmatpush.bf16.xpose.msra.mxu0 %v3431
      %3482 = vmatpush.bf16.xpose.msra.mxu0 %v3429
      %3483 = vmatpush.bf16.xpose.msra.mxu0 %v3427
      %3484 = vmatpush.bf16.xpose.msra.mxu0 %v3425
      %3485 = vmatpush.bf16.xpose.msra.mxu0 %v3423
      %3486 = vmatmul.bf16.gmra.mxu0 %v3373
      %v3487 = vpop.f32.mrf.mxu0
      %v3488 = vadd.f32 %v3370, %v3487
      %v3489 = vpop.f32.mrf.mxu0
      %3490 = vdwg.mxu0
      %v3491 = vld [vmem:[%s266] sm:$0xff]
      %v3492 = vunpack.c.l.bf16 %v3491
      %v3493 = vunpack.c.h.bf16 %v3491
      %3496 = vst [vmem:[#allocation1] ss:$2 sm:$0xff] %v3492
      %s3497 = scalar_lea.vmem [#allocation1], 16
      %3498 = vst [vmem:[%s3497] ss:$2 sm:$0xff] %v3493
      %v3499 = vld.sshfl [vmem:[#allocation1] sm:$0xff pattern:$0x75316420]
      %v3500 = vld.sshfl [vmem:[#allocation1 + $0x8] sm:$0xff pattern:$0x75316420]
      %v3501 = vld.sshfl [vmem:[#allocation1 + $0x10] sm:$0xff pattern:$0x75316420]
      %v3502 = vld.sshfl [vmem:[#allocation1 + $0x18] sm:$0xff pattern:$0x75316420]
      %v3507 = vadd.f32 %v3449, %v3499
      %v3508 = vadd.f32 %v3462, %v3500
      %v3509 = vadd.f32 %v3475, %v3501
      %v3510 = vadd.f32 %v3488, %v3502
      %v3511 = vmax.f32 %v3507, 0.0
      %v3512 = vmax.f32 %v3508, 0.0
      %v3513 = vmax.f32 %v3509, 0.0
      %v3514 = vmax.f32 %v3510, 0.0
      %v3519 = vrot.slane %v3512, 4
      %v3520 = vrot.slane %v3514, 4
      %vm3521 = vcmask 1043456
      %v3522 = vsel %vm3521, %v3511, %v3519
      %v3523 = vsel %vm3521, %v3513, %v3520
      %3526 = vst [vmem:[%s271] sm:$0xff] %v3522
      %3527 = vst [vmem:[%s271 + $0x8] sm:$0xff] %v3523
      %p3528 = scmp.lt.s32.totalorder %s17, 1
      %s3529 = scalar_select %p3528, %s17, 1
      %s3530 = smul.addr %s3529, 4
      %s3531 = smul.addr %s3530, 4
      %s3532 = scalar_lea.vmem %s6, %s3531
      // Predicated region
      $region45: #{basic_block_forward.1} parent=43 // pred_check
        %p3533 = pneg %p171
      $region46: #{basic_block_forward.1} parent=43 // pred_check_branch
        %3535 = sbr.rel (%p3533) target = $region48
      $region47: #{basic_block_forward.1} parent=43 // pred_region
        _
      $region48: #{basic_block_forward.1} parent=43 // pred_fallthru
        _
    $region44: #{basic_block_forward.1} parent=5 // pred_fallthru
      _
    %p3536 = scmp.le.s32.totalorder 2, %s12
    // Predicated region
    $region49: #{basic_block_forward.1} parent=5 // pred_check
      %p3537 = pneg %p3536
    $region50: #{basic_block_forward.1} parent=5 // pred_check_branch
      %3539 = sbr.rel (%p3537) target = $region52
    $region51: #{basic_block_forward.1} parent=5 // pred_region
      %s3540 = ssub.s32 %s12, 2
      // Predicated region
      $region53: #{basic_block_forward.1} parent=51 // pred_check
        %p3541 = pneg %p177
      $region54: #{basic_block_forward.1} parent=51 // pred_check_branch
        %3543 = sbr.rel (%p3541) target = $region56
      $region55: #{basic_block_forward.1} parent=51 // pred_region
        %p3544 = scmp.lt.s32.totalorder %s18, 1
        %s3545 = scalar_select %p3544, %s18, 1
        %s3546 = smul.addr %s3545, 4
        %s3547 = smul.addr %s3546, 4
        %s3548 = scalar_lea.vmem %s6, %s3547
      $region56: #{basic_block_forward.1} parent=51 // pred_fallthru
        _
    $region52: #{basic_block_forward.1} parent=5 // pred_fallthru
      _
  $region6: #{basic_block_forward.1} parent=0 // loop_footer
    %s16 = sadd.s32 1, %s12
  $region7: #{basic_block_forward.1} parent=0 // loop_footer_branch
    %11 = sbr.rel target = $region3
  $region8: #{basic_block_forward.1} parent=0 // loop_exit
    _

</llo_original>
